<compile_context>
chip_gen: v6e
topology: v6e:2x2x1
jax: 0.10.0
libtpu: 0.0.40
codegen_flags: <defaults>
</compile_context>

<pallas_src>
import math

import jax
import jax.numpy as jnp
from jax.experimental import pallas as pl
from jax.experimental.pallas import tpu as pltpu

# ---- model sizes (small, consistent with the module) ----
BATCH = 16                # total rows per call
BT = 8                    # batch rows per grid step
INPUT_SIZE = 128          # "BERT feature" width (small stand-in)
HIDDEN = 256              # hidden_size from the module
FC1 = 256
FC2 = 512
FC3 = 256
OUTPUT_SIZE = 8           # number of classes
HEAD_PAD = 128            # lane-dense padded head width (sliced to OUTPUT_SIZE in wrapper)
LN_EPS = 1e-5
LEAK = 0.01               # F.leaky_relu default negative_slope

H = HIDDEN

# ---- packed small-vector slab offsets (all multiples of 128 -> lane-aligned slices) ----
OFF_BLSTM = 0                       # combined LSTM bias, [i_f|i_b|g_f|g_b|o_f|o_b], width 6H
OFF_B1 = OFF_BLSTM + 6 * H          # 1536
OFF_G1 = OFF_B1 + FC1               # 1792
OFF_BE1 = OFF_G1 + FC1              # 2048
OFF_B2 = OFF_BE1 + FC1              # 2304
OFF_G2 = OFF_B2 + FC2               # 2816
OFF_BE2 = OFF_G2 + FC2              # 3328
OFF_B3 = OFF_BE2 + FC2              # 3840
OFF_G3 = OFF_B3 + FC3               # 4096
OFF_BE3 = OFF_G3 + FC3              # 4352
OFF_B4 = OFF_BE3 + FC3              # 4608
VEC_TOTAL = OFF_B4 + HEAD_PAD       # 4736 = 37 * 128


def enhanced_nn_kernel(x_ref, wlstm_ref, w13_ref, w24_ref, vec_ref, o_ref):
    # x tile: (BT, INPUT_SIZE) f32 -> bf16 for the MXU
    xb = x_ref[...].astype(jnp.bfloat16)

    # ---- fused bidirectional LSTM input projection (seq_len=1, h0=c0=0) ----
    # column layout: [i_fwd | i_bwd | g_fwd | g_bwd | o_fwd | o_bwd], each width H.
    # forget gate omitted entirely (f * c0 = 0); W_hh term vanishes (h0 = 0).
    gates = jnp.dot(xb, wlstm_ref[...], preferred_element_type=jnp.float32)
    gates = gates + vec_ref[:, OFF_BLSTM:OFF_BLSTM + 6 * H]
    i = jax.nn.sigmoid(gates[:, 0:2 * H])
    g = jnp.tanh(gates[:, 2 * H:4 * H])
    o = jax.nn.sigmoid(gates[:, 4 * H:6 * H])
    lstm_out = o * jnp.tanh(i * g)          # (BT, 2H) == [h_fwd | h_bwd] (PyTorch concat order)

    def leaky(z):
        return jnp.where(z >= 0, z, LEAK * z)

    def layer_norm(z, gamma, beta):
        mu = jnp.mean(z, axis=-1, keepdims=True)
        d = z - mu
        var = jnp.mean(d * d, axis=-1, keepdims=True)
        return d * jax.lax.rsqrt(var + LN_EPS) * gamma + beta

    # fc1 (the 0.1 input scale is pre-folded into w1), leaky_relu, ln1  [dropout1 = identity]
    a = jnp.dot(lstm_out.astype(jnp.bfloat16), w13_ref[:, 0:FC1],
                preferred_element_type=jnp.float32) + vec_ref[:, OFF_B1:OFF_B1 + FC1]
    a = layer_norm(leaky(a), vec_ref[:, OFF_G1:OFF_G1 + FC1], vec_ref[:, OFF_BE1:OFF_BE1 + FC1])

    # fc2, leaky_relu, ln2  [dropout2 = identity]
    a = jnp.dot(a.astype(jnp.bfloat16), w24_ref[:, 0:FC2],
                preferred_element_type=jnp.float32) + vec_ref[:, OFF_B2:OFF_B2 + FC2]
    a = layer_norm(leaky(a), vec_ref[:, OFF_G2:OFF_G2 + FC2], vec_ref[:, OFF_BE2:OFF_BE2 + FC2])

    # fc3, leaky_relu, ln3  [dropout3 = identity]
    a = jnp.dot(a.astype(jnp.bfloat16), w13_ref[:, FC1:FC1 + FC3],
                preferred_element_type=jnp.float32) + vec_ref[:, OFF_B3:OFF_B3 + FC3]
    a = layer_norm(leaky(a), vec_ref[:, OFF_G3:OFF_G3 + FC3], vec_ref[:, OFF_BE3:OFF_BE3 + FC3])

    # fc4 head, padded to 128 lanes for an unmasked, lane-dense store
    o_ref[...] = jnp.dot(a.astype(jnp.bfloat16), w24_ref[:, FC2:FC2 + HEAD_PAD],
                         preferred_element_type=jnp.float32) + vec_ref[:, OFF_B4:OFF_B4 + HEAD_PAD]


def enhanced_nn_forward(x, params):
    wlstm, w13, w24, vec = params
    B = x.shape[0]
    assert B % BT == 0, "batch must be a multiple of the batch tile"
    grid = (B // BT,)

    flops_per_row = 2 * (INPUT_SIZE * 6 * H + 2 * H * FC1 + FC1 * FC2 + FC2 * FC3 + FC3 * HEAD_PAD)
    weight_bytes = (wlstm.size + w13.size + w24.size) * 2 + vec.size * 4
    cost = pl.CostEstimate(
        flops=flops_per_row * B,
        transcendentals=B * (6 * H + FC1 + FC2 + FC3),   # sigmoid/tanh + LN rsqrt (rough)
        bytes_accessed=weight_bytes + x.size * 4 + B * HEAD_PAD * 4,
    )

    resident = lambda i: (0, 0)   # weights: same block every step -> DMA'd once, stay in VMEM
    out = pl.pallas_call(
        enhanced_nn_kernel,
        out_shape=jax.ShapeDtypeStruct((B, HEAD_PAD), jnp.float32),
        grid_spec=pltpu.PrefetchScalarGridSpec(
            num_scalar_prefetch=0,
            grid=grid,
            in_specs=[
                pl.BlockSpec((BT, INPUT_SIZE), lambda i: (i, 0)),
                pl.BlockSpec(wlstm.shape, resident),
                pl.BlockSpec(w13.shape, resident),
                pl.BlockSpec(w24.shape, resident),
                pl.BlockSpec(vec.shape, resident),
            ],
            out_specs=pl.BlockSpec((BT, HEAD_PAD), lambda i: (i, 0)),
        ),
        compiler_params=pltpu.CompilerParams(dimension_semantics=("parallel",)),
        cost_estimate=cost,
    )(x, wlstm, w13, w24, vec)
    return out[:, :OUTPUT_SIZE]


def init_params(key):
    """Deterministic parameter init (uniform, PyTorch-like scale), packed for the kernel."""
    ks = jax.random.split(key, 32)
    ki = iter(ks)

    def unif(k, shape, scale):
        return jax.random.uniform(k, shape, jnp.float32, -scale, scale)

    s_lstm = 1.0 / math.sqrt(HIDDEN)

    # Per-direction, per-gate LSTM input weights (forget gate never generated: it is dead
    # for seq_len=1 with c0=0). Stored pre-transposed as (INPUT_SIZE, H).
    wi_f = unif(next(ki), (INPUT_SIZE, H), s_lstm)
    wg_f = unif(next(ki), (INPUT_SIZE, H), s_lstm)
    wo_f = unif(next(ki), (INPUT_SIZE, H), s_lstm)
    wi_b = unif(next(ki), (INPUT_SIZE, H), s_lstm)
    wg_b = unif(next(ki), (INPUT_SIZE, H), s_lstm)
    wo_b = unif(next(ki), (INPUT_SIZE, H), s_lstm)

    def bias(k1, k2, n):           # combined b_ih + b_hh
        return unif(k1, (1, n), s_lstm) + unif(k2, (1, n), s_lstm)

    bi_f = bias(next(ki), next(ki), H)
    bg_f = bias(next(ki), next(ki), H)
    bo_f = bias(next(ki), next(ki), H)
    bi_b = bias(next(ki), next(ki), H)
    bg_b = bias(next(ki), next(ki), H)
    bo_b = bias(next(ki), next(ki), H)

    def linear(kw, kb, fan_in, fan_out):
        s = 1.0 / math.sqrt(fan_in)
        return unif(kw, (fan_in, fan_out), s), unif(kb, (1, fan_out), s)

    w1, b1 = linear(next(ki), next(ki), 2 * H, FC1)
    w2, b2 = linear(next(ki), next(ki), FC1, FC2)
    w3, b3 = linear(next(ki), next(ki), FC2, FC3)
    w4, b4 = linear(next(ki), next(ki), FC3, OUTPUT_SIZE)
    g1, be1 = jnp.ones((1, FC1), jnp.float32), jnp.zeros((1, FC1), jnp.float32)
    g2, be2 = jnp.ones((1, FC2), jnp.float32), jnp.zeros((1, FC2), jnp.float32)
    g3, be3 = jnp.ones((1, FC3), jnp.float32), jnp.zeros((1, FC3), jnp.float32)

    # ---- pack into 3 bf16 weight slabs + 1 f32 vector slab ----
    wlstm = jnp.concatenate([wi_f, wi_b, wg_f, wg_b, wo_f, wo_b], axis=1).astype(jnp.bfloat16)
    w13 = jnp.concatenate([w1 * 0.1, w3], axis=1).astype(jnp.bfloat16)      # 0.1 folded into w1
    w4p = jnp.zeros((FC3, HEAD_PAD), jnp.float32).at[:, :OUTPUT_SIZE].set(w4)
    w24 = jnp.concatenate([w2, w4p], axis=1).astype(jnp.bfloat16)
    b4p = jnp.zeros((1, HEAD_PAD), jnp.float32).at[:, :OUTPUT_SIZE].set(b4)
    b_lstm = jnp.concatenate([bi_f, bi_b, bg_f, bg_b, bo_f, bo_b], axis=1)
    vec = jnp.concatenate([b_lstm, b1, g1, be1, b2, g2, be2, b3, g3, be3, b4p],
                          axis=1).astype(jnp.float32)
    assert vec.shape == (1, VEC_TOTAL)

    return wlstm, w13, w24, vec


def reference_forward(x, params):
    """Pure-JAX reference of the same packed math (for a sanity check)."""
    wlstm, w13, w24, vec = params
    gates = jnp.dot(x.astype(jnp.bfloat16), wlstm,
                    preferred_element_type=jnp.float32) + vec[:, :6 * H]
    i = jax.nn.sigmoid(gates[:, :2 * H])
    g = jnp.tanh(gates[:, 2 * H:4 * H])
    o = jax.nn.sigmoid(gates[:, 4 * H:])
    h = o * jnp.tanh(i * g)

    def leaky(z):
        return jnp.where(z >= 0, z, LEAK * z)

    def ln(z, gam, bet):
        mu = jnp.mean(z, -1, keepdims=True)
        d = z - mu
        var = jnp.mean(d * d, -1, keepdims=True)
        return d * jax.lax.rsqrt(var + LN_EPS) * gam + bet

    a = ln(leaky(jnp.dot(h.astype(jnp.bfloat16), w13[:, :FC1], preferred_element_type=jnp.float32)
                 + vec[:, OFF_B1:OFF_B1 + FC1]),
           vec[:, OFF_G1:OFF_G1 + FC1], vec[:, OFF_BE1:OFF_BE1 + FC1])
    a = ln(leaky(jnp.dot(a.astype(jnp.bfloat16), w24[:, :FC2], preferred_element_type=jnp.float32)
                 + vec[:, OFF_B2:OFF_B2 + FC2]),
           vec[:, OFF_G2:OFF_G2 + FC2], vec[:, OFF_BE2:OFF_BE2 + FC2])
    a = ln(leaky(jnp.dot(a.astype(jnp.bfloat16), w13[:, FC1:], preferred_element_type=jnp.float32)
                 + vec[:, OFF_B3:OFF_B3 + FC3]),
           vec[:, OFF_G3:OFF_G3 + FC3], vec[:, OFF_BE3:OFF_BE3 + FC3])
    out = jnp.dot(a.astype(jnp.bfloat16), w24[:, FC2:], preferred_element_type=jnp.float32) \
        + vec[:, OFF_B4:]
    return out[:, :OUTPUT_SIZE]


if __name__ == "__main__":
    key = jax.random.PRNGKey(0)
    k_x, k_p = jax.random.split(key)
    x = jax.random.normal(k_x, (BATCH, INPUT_SIZE), jnp.float32)
    params = init_params(k_p)

    out = enhanced_nn_forward(x, params)
    out = jax.block_until_ready(out)
    assert out.shape == (BATCH, OUTPUT_SIZE)
    assert bool(jnp.all(jnp.isfinite(out)))

    ref = jax.block_until_ready(reference_forward(x, params))
    assert float(jnp.max(jnp.abs(out - ref))) < 1e-2

    print("KERNEL_OK")
</pallas_src>

<mosaic_0001>
module attributes {stable_mosaic.version = 11 : i64} {
  func.func @enhanced_nn_kernel(%arg0: i32, %arg1: memref<8x128xf32, #tpu.memory_space<vmem>>, %arg2: memref<128x1536xbf16, #tpu.memory_space<vmem>>, %arg3: memref<512x512xbf16, #tpu.memory_space<vmem>>, %arg4: memref<256x640xbf16, #tpu.memory_space<vmem>>, %arg5: memref<1x4736xf32, #tpu.memory_space<vmem>>, %arg6: memref<8x128xf32, #tpu.memory_space<vmem>>) attributes {dimension_semantics = [#tpu.dimension_semantics<parallel>], iteration_bounds = array<i64: 2>, scalar_prefetch = 0 : i64, scratch_operands = 0 : i64, tpu.core_type = #tpu.core_type<tc>, window_params = [{transform_indices = @transform_0, window_bounds = array<i64: 8, 128>}, {pipeline_mode = #tpu.pipeline_mode<synchronous>, transform_indices = @transform_1, window_bounds = array<i64: 128, 1536>}, {pipeline_mode = #tpu.pipeline_mode<synchronous>, transform_indices = @transform_2, window_bounds = array<i64: 512, 512>}, {pipeline_mode = #tpu.pipeline_mode<synchronous>, transform_indices = @transform_3, window_bounds = array<i64: 256, 640>}, {pipeline_mode = #tpu.pipeline_mode<synchronous>, transform_indices = @transform_4, window_bounds = array<i64: 1, 4736>}, {transform_indices = @transform_5, window_bounds = array<i64: 8, 128>}]} {
    %c0 = arith.constant 0 : index
    %c0_0 = arith.constant 0 : index
    %0 = vector.load %arg1[%c0, %c0_0] : memref<8x128xf32, #tpu.memory_space<vmem>>, vector<8x128xf32>
    %1 = arith.truncf %0 : vector<8x128xf32> to vector<8x128xbf16>
    %c0_1 = arith.constant 0 : index
    %c0_2 = arith.constant 0 : index
    %2 = vector.load %arg2[%c0_1, %c0_2] : memref<128x1536xbf16, #tpu.memory_space<vmem>>, vector<128x1536xbf16>
    %cst = arith.constant dense<0.000000e+00> : vector<8x1536xf32>
    %3 = tpu.matmul %1, %2, %cst {dimension_numbers = #tpu.dot_dimension_numbers<[1], [0], [0], [1], [0, 0, 1, 1], [], []>} : vector<8x128xbf16>, vector<128x1536xbf16>, vector<8x1536xf32> -> vector<8x1536xf32>
    %c0_3 = arith.constant 0 : index
    %c0_4 = arith.constant 0 : index
    %4 = vector.load %arg5[%c0_3, %c0_4] : memref<1x4736xf32, #tpu.memory_space<vmem>>, vector<1x1536xf32>
    %5 = vector.broadcast %4 : vector<1x1536xf32> to vector<8x1536xf32>
    %6 = arith.addf %3, %5 : vector<8x1536xf32>
    %7 = vector.extract_strided_slice %6 {offsets = [0, 0], sizes = [8, 512], strides = [1, 1]} : vector<8x1536xf32> to vector<8x512xf32>
    %8 = arith.negf %7 : vector<8x512xf32>
    %9 = math.exp %8 : vector<8x512xf32>
    %cst_5 = arith.constant 1.000000e+00 : f32
    %10 = vector.broadcast %cst_5 : f32 to vector<8x512xf32>
    %11 = arith.addf %10, %9 : vector<8x512xf32>
    %12 = arith.divf %10, %11 : vector<8x512xf32>
    %13 = vector.extract_strided_slice %6 {offsets = [0, 512], sizes = [8, 512], strides = [1, 1]} : vector<8x1536xf32> to vector<8x512xf32>
    %14 = math.tanh %13 : vector<8x512xf32>
    %15 = vector.extract_strided_slice %6 {offsets = [0, 1024], sizes = [8, 512], strides = [1, 1]} : vector<8x1536xf32> to vector<8x512xf32>
    %16 = arith.negf %15 : vector<8x512xf32>
    %17 = math.exp %16 : vector<8x512xf32>
    %cst_6 = arith.constant 1.000000e+00 : f32
    %18 = vector.broadcast %cst_6 : f32 to vector<8x512xf32>
    %19 = arith.addf %18, %17 : vector<8x512xf32>
    %20 = arith.divf %18, %19 : vector<8x512xf32>
    %21 = arith.mulf %12, %14 : vector<8x512xf32>
    %22 = math.tanh %21 : vector<8x512xf32>
    %23 = arith.mulf %20, %22 : vector<8x512xf32>
    %24 = arith.truncf %23 : vector<8x512xf32> to vector<8x512xbf16>
    %c0_7 = arith.constant 0 : index
    %c0_8 = arith.constant 0 : index
    %25 = vector.load %arg3[%c0_7, %c0_8] : memref<512x512xbf16, #tpu.memory_space<vmem>>, vector<512x256xbf16>
    %cst_9 = arith.constant dense<0.000000e+00> : vector<8x256xf32>
    %26 = tpu.matmul %24, %25, %cst_9 {dimension_numbers = #tpu.dot_dimension_numbers<[1], [0], [0], [1], [0, 0, 1, 1], [], []>} : vector<8x512xbf16>, vector<512x256xbf16>, vector<8x256xf32> -> vector<8x256xf32>
    %c0_10 = arith.constant 0 : index
    %c1536 = arith.constant 1536 : index
    %27 = vector.load %arg5[%c0_10, %c1536] : memref<1x4736xf32, #tpu.memory_space<vmem>>, vector<1x256xf32>
    %28 = vector.broadcast %27 : vector<1x256xf32> to vector<8x256xf32>
    %29 = arith.addf %26, %28 : vector<8x256xf32>
    %cst_11 = arith.constant 0.000000e+00 : f32
    %30 = vector.broadcast %cst_11 : f32 to vector<8x256xf32>
    %31 = arith.cmpf oge, %29, %30 : vector<8x256xf32>
    %cst_12 = arith.constant 0.00999999977 : f32
    %32 = vector.broadcast %cst_12 : f32 to vector<8x256xf32>
    %33 = arith.mulf %32, %29 : vector<8x256xf32>
    %34 = arith.select %31, %29, %33 : vector<8x256xi1>, vector<8x256xf32>
    %c0_13 = arith.constant 0 : index
    %c1792 = arith.constant 1792 : index
    %35 = vector.load %arg5[%c0_13, %c1792] : memref<1x4736xf32, #tpu.memory_space<vmem>>, vector<1x256xf32>
    %c0_14 = arith.constant 0 : index
    %c2048 = arith.constant 2048 : index
    %36 = vector.load %arg5[%c0_14, %c2048] : memref<1x4736xf32, #tpu.memory_space<vmem>>, vector<1x256xf32>
    %cst_15 = arith.constant dense<0.000000e+00> : vector<8xf32>
    %37 = vector.multi_reduction <add>, %34, %cst_15 [1] : vector<8x256xf32> to vector<8xf32>
    %38 = vector.shape_cast %37 : vector<8xf32> to vector<8x1xf32>
    %cst_16 = arith.constant 2.560000e+02 : f32
    %39 = vector.broadcast %cst_16 : f32 to vector<8x1xf32>
    %40 = arith.divf %38, %39 : vector<8x1xf32>
    %41 = vector.broadcast %40 : vector<8x1xf32> to vector<8x256xf32>
    %42 = arith.subf %34, %41 : vector<8x256xf32>
    %43 = arith.mulf %42, %42 : vector<8x256xf32>
    %cst_17 = arith.constant dense<0.000000e+00> : vector<8xf32>
    %44 = vector.multi_reduction <add>, %43, %cst_17 [1] : vector<8x256xf32> to vector<8xf32>
    %45 = vector.shape_cast %44 : vector<8xf32> to vector<8x1xf32>
    %cst_18 = arith.constant 2.560000e+02 : f32
    %46 = vector.broadcast %cst_18 : f32 to vector<8x1xf32>
    %47 = arith.divf %45, %46 : vector<8x1xf32>
    %cst_19 = arith.constant 9.99999974E-6 : f32
    %48 = vector.broadcast %cst_19 : f32 to vector<8x1xf32>
    %49 = arith.addf %47, %48 : vector<8x1xf32>
    %50 = math.rsqrt %49 : vector<8x1xf32>
    %51 = vector.broadcast %50 : vector<8x1xf32> to vector<8x256xf32>
    %52 = arith.mulf %42, %51 : vector<8x256xf32>
    %53 = vector.broadcast %35 : vector<1x256xf32> to vector<8x256xf32>
    %54 = arith.mulf %52, %53 : vector<8x256xf32>
    %55 = vector.broadcast %36 : vector<1x256xf32> to vector<8x256xf32>
    %56 = arith.addf %54, %55 : vector<8x256xf32>
    %57 = arith.truncf %56 : vector<8x256xf32> to vector<8x256xbf16>
    %c0_20 = arith.constant 0 : index
    %c0_21 = arith.constant 0 : index
    %58 = vector.load %arg4[%c0_20, %c0_21] : memref<256x640xbf16, #tpu.memory_space<vmem>>, vector<256x512xbf16>
    %cst_22 = arith.constant dense<0.000000e+00> : vector<8x512xf32>
    %59 = tpu.matmul %57, %58, %cst_22 {dimension_numbers = #tpu.dot_dimension_numbers<[1], [0], [0], [1], [0, 0, 1, 1], [], []>} : vector<8x256xbf16>, vector<256x512xbf16>, vector<8x512xf32> -> vector<8x512xf32>
    %c0_23 = arith.constant 0 : index
    %c2304 = arith.constant 2304 : index
    %60 = vector.load %arg5[%c0_23, %c2304] : memref<1x4736xf32, #tpu.memory_space<vmem>>, vector<1x512xf32>
    %61 = vector.broadcast %60 : vector<1x512xf32> to vector<8x512xf32>
    %62 = arith.addf %59, %61 : vector<8x512xf32>
    %cst_24 = arith.constant 0.000000e+00 : f32
    %63 = vector.broadcast %cst_24 : f32 to vector<8x512xf32>
    %64 = arith.cmpf oge, %62, %63 : vector<8x512xf32>
    %cst_25 = arith.constant 0.00999999977 : f32
    %65 = vector.broadcast %cst_25 : f32 to vector<8x512xf32>
    %66 = arith.mulf %65, %62 : vector<8x512xf32>
    %67 = arith.select %64, %62, %66 : vector<8x512xi1>, vector<8x512xf32>
    %c0_26 = arith.constant 0 : index
    %c2816 = arith.constant 2816 : index
    %68 = vector.load %arg5[%c0_26, %c2816] : memref<1x4736xf32, #tpu.memory_space<vmem>>, vector<1x512xf32>
    %c0_27 = arith.constant 0 : index
    %c3328 = arith.constant 3328 : index
    %69 = vector.load %arg5[%c0_27, %c3328] : memref<1x4736xf32, #tpu.memory_space<vmem>>, vector<1x512xf32>
    %cst_28 = arith.constant dense<0.000000e+00> : vector<8xf32>
    %70 = vector.multi_reduction <add>, %67, %cst_28 [1] : vector<8x512xf32> to vector<8xf32>
    %71 = vector.shape_cast %70 : vector<8xf32> to vector<8x1xf32>
    %cst_29 = arith.constant 5.120000e+02 : f32
    %72 = vector.broadcast %cst_29 : f32 to vector<8x1xf32>
    %73 = arith.divf %71, %72 : vector<8x1xf32>
    %74 = vector.broadcast %73 : vector<8x1xf32> to vector<8x512xf32>
    %75 = arith.subf %67, %74 : vector<8x512xf32>
    %76 = arith.mulf %75, %75 : vector<8x512xf32>
    %cst_30 = arith.constant dense<0.000000e+00> : vector<8xf32>
    %77 = vector.multi_reduction <add>, %76, %cst_30 [1] : vector<8x512xf32> to vector<8xf32>
    %78 = vector.shape_cast %77 : vector<8xf32> to vector<8x1xf32>
    %cst_31 = arith.constant 5.120000e+02 : f32
    %79 = vector.broadcast %cst_31 : f32 to vector<8x1xf32>
    %80 = arith.divf %78, %79 : vector<8x1xf32>
    %cst_32 = arith.constant 9.99999974E-6 : f32
    %81 = vector.broadcast %cst_32 : f32 to vector<8x1xf32>
    %82 = arith.addf %80, %81 : vector<8x1xf32>
    %83 = math.rsqrt %82 : vector<8x1xf32>
    %84 = vector.broadcast %83 : vector<8x1xf32> to vector<8x512xf32>
    %85 = arith.mulf %75, %84 : vector<8x512xf32>
    %86 = vector.broadcast %68 : vector<1x512xf32> to vector<8x512xf32>
    %87 = arith.mulf %85, %86 : vector<8x512xf32>
    %88 = vector.broadcast %69 : vector<1x512xf32> to vector<8x512xf32>
    %89 = arith.addf %87, %88 : vector<8x512xf32>
    %90 = arith.truncf %89 : vector<8x512xf32> to vector<8x512xbf16>
    %c0_33 = arith.constant 0 : index
    %c256 = arith.constant 256 : index
    %91 = vector.load %arg3[%c0_33, %c256] : memref<512x512xbf16, #tpu.memory_space<vmem>>, vector<512x256xbf16>
    %cst_34 = arith.constant dense<0.000000e+00> : vector<8x256xf32>
    %92 = tpu.matmul %90, %91, %cst_34 {dimension_numbers = #tpu.dot_dimension_numbers<[1], [0], [0], [1], [0, 0, 1, 1], [], []>} : vector<8x512xbf16>, vector<512x256xbf16>, vector<8x256xf32> -> vector<8x256xf32>
    %c0_35 = arith.constant 0 : index
    %c3840 = arith.constant 3840 : index
    %93 = vector.load %arg5[%c0_35, %c3840] : memref<1x4736xf32, #tpu.memory_space<vmem>>, vector<1x256xf32>
    %94 = vector.broadcast %93 : vector<1x256xf32> to vector<8x256xf32>
    %95 = arith.addf %92, %94 : vector<8x256xf32>
    %cst_36 = arith.constant 0.000000e+00 : f32
    %96 = vector.broadcast %cst_36 : f32 to vector<8x256xf32>
    %97 = arith.cmpf oge, %95, %96 : vector<8x256xf32>
    %cst_37 = arith.constant 0.00999999977 : f32
    %98 = vector.broadcast %cst_37 : f32 to vector<8x256xf32>
    %99 = arith.mulf %98, %95 : vector<8x256xf32>
    %100 = arith.select %97, %95, %99 : vector<8x256xi1>, vector<8x256xf32>
    %c0_38 = arith.constant 0 : index
    %c4096 = arith.constant 4096 : index
    %101 = vector.load %arg5[%c0_38, %c4096] : memref<1x4736xf32, #tpu.memory_space<vmem>>, vector<1x256xf32>
    %c0_39 = arith.constant 0 : index
    %c4352 = arith.constant 4352 : index
    %102 = vector.load %arg5[%c0_39, %c4352] : memref<1x4736xf32, #tpu.memory_space<vmem>>, vector<1x256xf32>
    %cst_40 = arith.constant dense<0.000000e+00> : vector<8xf32>
    %103 = vector.multi_reduction <add>, %100, %cst_40 [1] : vector<8x256xf32> to vector<8xf32>
    %104 = vector.shape_cast %103 : vector<8xf32> to vector<8x1xf32>
    %cst_41 = arith.constant 2.560000e+02 : f32
    %105 = vector.broadcast %cst_41 : f32 to vector<8x1xf32>
    %106 = arith.divf %104, %105 : vector<8x1xf32>
    %107 = vector.broadcast %106 : vector<8x1xf32> to vector<8x256xf32>
    %108 = arith.subf %100, %107 : vector<8x256xf32>
    %109 = arith.mulf %108, %108 : vector<8x256xf32>
    %cst_42 = arith.constant dense<0.000000e+00> : vector<8xf32>
    %110 = vector.multi_reduction <add>, %109, %cst_42 [1] : vector<8x256xf32> to vector<8xf32>
    %111 = vector.shape_cast %110 : vector<8xf32> to vector<8x1xf32>
    %cst_43 = arith.constant 2.560000e+02 : f32
    %112 = vector.broadcast %cst_43 : f32 to vector<8x1xf32>
    %113 = arith.divf %111, %112 : vector<8x1xf32>
    %cst_44 = arith.constant 9.99999974E-6 : f32
    %114 = vector.broadcast %cst_44 : f32 to vector<8x1xf32>
    %115 = arith.addf %113, %114 : vector<8x1xf32>
    %116 = math.rsqrt %115 : vector<8x1xf32>
    %117 = vector.broadcast %116 : vector<8x1xf32> to vector<8x256xf32>
    %118 = arith.mulf %108, %117 : vector<8x256xf32>
    %119 = vector.broadcast %101 : vector<1x256xf32> to vector<8x256xf32>
    %120 = arith.mulf %118, %119 : vector<8x256xf32>
    %121 = vector.broadcast %102 : vector<1x256xf32> to vector<8x256xf32>
    %122 = arith.addf %120, %121 : vector<8x256xf32>
    %123 = arith.truncf %122 : vector<8x256xf32> to vector<8x256xbf16>
    %c0_45 = arith.constant 0 : index
    %c512 = arith.constant 512 : index
    %124 = vector.load %arg4[%c0_45, %c512] : memref<256x640xbf16, #tpu.memory_space<vmem>>, vector<256x128xbf16>
    %cst_46 = arith.constant dense<0.000000e+00> : vector<8x128xf32>
    %125 = tpu.matmul %123, %124, %cst_46 {dimension_numbers = #tpu.dot_dimension_numbers<[1], [0], [0], [1], [0, 0, 1, 1], [], []>} : vector<8x256xbf16>, vector<256x128xbf16>, vector<8x128xf32> -> vector<8x128xf32>
    %c0_47 = arith.constant 0 : index
    %c4608 = arith.constant 4608 : index
    %126 = vector.load %arg5[%c0_47, %c4608] : memref<1x4736xf32, #tpu.memory_space<vmem>>, vector<1x128xf32>
    %127 = vector.broadcast %126 : vector<1x128xf32> to vector<8x128xf32>
    %128 = arith.addf %125, %127 : vector<8x128xf32>
    %c0_48 = arith.constant 0 : index
    %c0_49 = arith.constant 0 : index
    %129 = vector.load %arg6[%c0_48, %c0_49] : memref<8x128xf32, #tpu.memory_space<vmem>>, vector<8x128xf32>
    tpu.vector_store %arg6[%c0_48, %c0_49], %128 {strides = array<i32>} : memref<8x128xf32, #tpu.memory_space<vmem>>, vector<8x128xf32>,
    return
  }
  func.func @transform_0(%arg0: i32) -> (i32, i32) {
    %c0_i32 = arith.constant 0 : i32
    %c0_i32_0 = arith.constant 0 : i32
    return %arg0, %c0_i32 : i32, i32
  }
  func.func @transform_1(%arg0: i32) -> (i32, i32) {
    %c0_i32 = arith.constant 0 : i32
    %c0_i32_0 = arith.constant 0 : i32
    %c0_i32_1 = arith.constant 0 : i32
    return %c0_i32, %c0_i32_0 : i32, i32
  }
  func.func @transform_2(%arg0: i32) -> (i32, i32) {
    %c0_i32 = arith.constant 0 : i32
    %c0_i32_0 = arith.constant 0 : i32
    %c0_i32_1 = arith.constant 0 : i32
    return %c0_i32, %c0_i32_0 : i32, i32
  }
  func.func @transform_3(%arg0: i32) -> (i32, i32) {
    %c0_i32 = arith.constant 0 : i32
    %c0_i32_0 = arith.constant 0 : i32
    %c0_i32_1 = arith.constant 0 : i32
    return %c0_i32, %c0_i32_0 : i32, i32
  }
  func.func @transform_4(%arg0: i32) -> (i32, i32) {
    %c0_i32 = arith.constant 0 : i32
    %c0_i32_0 = arith.constant 0 : i32
    %c0_i32_1 = arith.constant 0 : i32
    return %c0_i32, %c0_i32_0 : i32, i32
  }
  func.func @transform_5(%arg0: i32) -> (i32, i32) {
    %c0_i32 = arith.constant 0 : i32
    %c0_i32_0 = arith.constant 0 : i32
    return %arg0, %c0_i32 : i32, i32
  }
}

</mosaic_0001>

<llo_original>
// kernel: tpu_custom_call.1
$region0: #{tpu_custom_call.1}
  #allocation0 [shape = 'u32[]', space=smem, size = 0x4, offset = 0x4, fixed_abs, tag = 'smem constant byte address 0x4 - core index']
  #allocation1 [shape = 'u32[144,128]{1,0:T(1,128)}', space=vmem, size = 0x12000, scoped, tag = 'internal scratch']
  %s0 = inlined_call_operand.hbm [shape: f32[16,128], index: 0, kind: input, shape index: {}]
  %s1 = inlined_call_operand.hbm [shape: bf16[128,1536], index: 1, kind: input, shape index: {}]
  %s2 = inlined_call_operand.hbm [shape: bf16[512,512], index: 2, kind: input, shape index: {}]
  %s3 = inlined_call_operand.hbm [shape: bf16[256,640], index: 3, kind: input, shape index: {}]
  %s4 = inlined_call_operand.hbm [shape: f32[1,4736], index: 4, kind: input, shape index: {}]
  %s5 = inlined_call_operand.hbm [shape: f32[16,128], index: 5, kind: output, shape index: {}]
  %s6 = sld [smem:[#allocation0]]
  $region73: #{tpu_custom_call.1} parent=0
    _
  %s8 = ssub.s32 1, %s6
  %s9 = scalar_select 0, %s8, %s6
  $region1: #{tpu_custom_call.1} parent=0
    #allocation2 [shape = 'u8[8192]{0}', space=vmem, size = 0x2000, scoped, tag = 'input window, operand 0']
    #allocation3 [shape = 's32[2]{0}', space=sflag, size = 0x8, scoped, tag = 'scoped memory for tpu_custom_call.1']
    #allocation4 [shape = 's32[2]{0}', space=sflag, size = 0x8, scoped, tag = 'scoped memory for tpu_custom_call.1']
    #allocation5 [shape = 'u8[393216]{0}', space=vmem, size = 0x60000, scoped, tag = 'input window, operand 1, single buffered']
    #allocation6 [shape = 's32[1]{0}', space=sflag, size = 0x4, scoped, tag = 'scoped memory for tpu_custom_call.1']
    #allocation7 [shape = 'u8[524288]{0}', space=vmem, size = 0x80000, scoped, tag = 'input window, operand 2, single buffered']
    #allocation8 [shape = 'u8[327680]{0}', space=vmem, size = 0x50000, scoped, tag = 'input window, operand 3, single buffered']
    #allocation9 [shape = 's32[1]{0}', space=sflag, size = 0x4, scoped, tag = 'scoped memory for tpu_custom_call.1']
    #allocation10 [shape = 'u8[18944]{0}', space=vmem, size = 0x4c00, scoped, tag = 'input window, operand 4, single buffered']
    #allocation11 [shape = 'u8[8192]{0}', space=vmem, size = 0x2000, scoped, tag = 'output window, operand 0']
    %10 = vsyncpa [#allocation3], 0
    %s11 = scalar_lea.sflag [#allocation3], 1
    %12 = vsyncpa %s11, 0
    %13 = vsyncpa [#allocation6], 0
    %14 = vsyncpa [#allocation9], 0
    %15 = vsyncpa [#allocation4], 0
    %s16 = scalar_lea.sflag [#allocation4], 1
    %17 = vsyncpa %s16, 0
    loop: start=0, step=1, limit=4
    $region2: #{tpu_custom_call.1} parent=1 // loop_pre_header
      _
    $region3: #{tpu_custom_call.1} parent=1 // loop_header
      %s19 = sphi 0, %s23
      %p20 = scmp.ge.s32.totalorder %s19, 4
      %s29 = sphi 0, %s31
      %s32 = sphi 0, %s29
      %s33 = sphi 0, %s32
      %s49 = sphi 0, %s33
      %s53 = sphi 0, %s53
      %s55 = sphi 0, %s53
      %s56 = sphi 0, %s55
      %s70 = sphi 0, %s56
      %s74 = sphi 0, %s74
      %s76 = sphi 0, %s74
      %s77 = sphi 0, %s76
      %s91 = sphi 0, %s77
      %s95 = sphi 0, %s95
      %s97 = sphi 0, %s95
      %s98 = sphi 0, %s97
      %s112 = sphi 0, %s98
      %s116 = sphi 0, %s116
      %s118 = sphi 0, %s116
      %s119 = sphi 0, %s118
      %s133 = sphi 0, %s119
      %s139 = sphi 0, %s141
      %s142 = sphi 0, %s139
      %s143 = sphi 0, %s142
      %s159 = sphi 0, %s143
    $region4: #{tpu_custom_call.1} parent=1 // loop_header_branch
      %22 = sbr.rel (%p20) target = $region8
    $region5: #{tpu_custom_call.1} parent=1 // loop_body
      %s24 = ssub.s32 %s19, 1
      %s25 = ssub.s32 %s19, 2
      %s26 = sadd.s32 %s19, 1
      %s27 = ssub.s32 %s19, %s26
      %p28 = scmp.eq.s32.totalorder %s27, 0
      %s30 = sadd.s32 %s29, 1
      %s31 = scalar_select %p28, %s29, %s30
      %p34 = pneg %p28
      %p35 = scmp.eq.s32.totalorder %s19, 1
      %p36 = por %p34, %p35
      %p37 = scmp.ne.s32.totalorder %s29, %s32
      %p38 = scmp.eq.s32.totalorder %s19, 0
      %p39 = por %p37, %p38
      %p40 = scmp.ne.s32.totalorder %s29, %s32
      %p41 = scmp.eq.s32.totalorder %s24, 1
      %p42 = por %p40, %p41
      %p43 = scmp.ne.s32.totalorder %s32, %s33
      %p44 = scmp.eq.s32.totalorder %s24, 0
      %p45 = por %p43, %p44
      %p46 = scmp.ne.s32.totalorder %s32, %s33
      %p47 = scmp.eq.s32.totalorder %s25, 1
      %p48 = por %p46, %p47
      %p50 = scmp.ne.s32.totalorder %s33, %s49
      %p51 = scmp.eq.s32.totalorder %s25, 0
      %p52 = por %p50, %p51
      %s54 = sadd.s32 %s53, 1
      %p57 = scmp.eq.s32.totalorder %s19, 1
      %p58 = scmp.ne.s32.totalorder %s53, %s55
      %p59 = scmp.eq.s32.totalorder %s19, 0
      %p60 = por %p58, %p59
      %p61 = scmp.ne.s32.totalorder %s53, %s55
      %p62 = scmp.eq.s32.totalorder %s24, 1
      %p63 = por %p61, %p62
      %p64 = scmp.ne.s32.totalorder %s55, %s56
      %p65 = scmp.eq.s32.totalorder %s24, 0
      %p66 = por %p64, %p65
      %p67 = scmp.ne.s32.totalorder %s55, %s56
      %p68 = scmp.eq.s32.totalorder %s25, 1
      %p69 = por %p67, %p68
      %p71 = scmp.ne.s32.totalorder %s56, %s70
      %p72 = scmp.eq.s32.totalorder %s25, 0
      %p73 = por %p71, %p72
      %s75 = sadd.s32 %s74, 1
      %p78 = scmp.eq.s32.totalorder %s19, 1
      %p79 = scmp.ne.s32.totalorder %s74, %s76
      %p80 = scmp.eq.s32.totalorder %s19, 0
      %p81 = por %p79, %p80
      %p82 = scmp.ne.s32.totalorder %s74, %s76
      %p83 = scmp.eq.s32.totalorder %s24, 1
      %p84 = por %p82, %p83
      %p85 = scmp.ne.s32.totalorder %s76, %s77
      %p86 = scmp.eq.s32.totalorder %s24, 0
      %p87 = por %p85, %p86
      %p88 = scmp.ne.s32.totalorder %s76, %s77
      %p89 = scmp.eq.s32.totalorder %s25, 1
      %p90 = por %p88, %p89
      %p92 = scmp.ne.s32.totalorder %s77, %s91
      %p93 = scmp.eq.s32.totalorder %s25, 0
      %p94 = por %p92, %p93
      %s96 = sadd.s32 %s95, 1
      %p99 = scmp.eq.s32.totalorder %s19, 1
      %p100 = scmp.ne.s32.totalorder %s95, %s97
      %p101 = scmp.eq.s32.totalorder %s19, 0
      %p102 = por %p100, %p101
      %p103 = scmp.ne.s32.totalorder %s95, %s97
      %p104 = scmp.eq.s32.totalorder %s24, 1
      %p105 = por %p103, %p104
      %p106 = scmp.ne.s32.totalorder %s97, %s98
      %p107 = scmp.eq.s32.totalorder %s24, 0
      %p108 = por %p106, %p107
      %p109 = scmp.ne.s32.totalorder %s97, %s98
      %p110 = scmp.eq.s32.totalorder %s25, 1
      %p111 = por %p109, %p110
      %p113 = scmp.ne.s32.totalorder %s98, %s112
      %p114 = scmp.eq.s32.totalorder %s25, 0
      %p115 = por %p113, %p114
      %s117 = sadd.s32 %s116, 1
      %p120 = scmp.eq.s32.totalorder %s19, 1
      %p121 = scmp.ne.s32.totalorder %s116, %s118
      %p122 = scmp.eq.s32.totalorder %s19, 0
      %p123 = por %p121, %p122
      %p124 = scmp.ne.s32.totalorder %s116, %s118
      %p125 = scmp.eq.s32.totalorder %s24, 1
      %p126 = por %p124, %p125
      %p127 = scmp.ne.s32.totalorder %s118, %s119
      %p128 = scmp.eq.s32.totalorder %s24, 0
      %p129 = por %p127, %p128
      %p130 = scmp.ne.s32.totalorder %s118, %s119
      %p131 = scmp.eq.s32.totalorder %s25, 1
      %p132 = por %p130, %p131
      %p134 = scmp.ne.s32.totalorder %s119, %s133
      %p135 = scmp.eq.s32.totalorder %s25, 0
      %p136 = por %p134, %p135
      %s137 = ssub.s32 %s19, %s26
      %p138 = scmp.eq.s32.totalorder %s137, 0
      %s140 = sadd.s32 %s139, 1
      %s141 = scalar_select %p138, %s139, %s140
      %p144 = pneg %p138
      %p145 = scmp.eq.s32.totalorder %s19, 1
      %p146 = por %p144, %p145
      %p147 = scmp.ne.s32.totalorder %s139, %s142
      %p148 = scmp.eq.s32.totalorder %s19, 0
      %p149 = por %p147, %p148
      %p150 = scmp.ne.s32.totalorder %s139, %s142
      %p151 = scmp.eq.s32.totalorder %s24, 1
      %p152 = por %p150, %p151
      %p153 = scmp.ne.s32.totalorder %s142, %s143
      %p154 = scmp.eq.s32.totalorder %s24, 0
      %p155 = por %p153, %p154
      %p156 = scmp.ne.s32.totalorder %s142, %s143
      %p157 = scmp.eq.s32.totalorder %s25, 1
      %p158 = por %p156, %p157
      %p160 = scmp.ne.s32.totalorder %s143, %s159
      %p161 = scmp.eq.s32.totalorder %s25, 0
      %p162 = por %p160, %p161
      %p163 = scmp.le.s32.totalorder 1, %s19
      %p164 = scmp.lt.s32.totalorder %s19, 3
      %p165 = pnand %p163, %p164
      %p166 = pneg %p165
      // Predicated region
      $region9: #{tpu_custom_call.1} parent=5 // pred_check
        _
      $region10: #{tpu_custom_call.1} parent=5 // pred_check_branch
        %168 = sbr.rel (%p165) target = $region12
      $region11: #{tpu_custom_call.1} parent=5 // pred_region
        %s169 = ssub.s32 %s19, 1
        // Predicated region
        $region13: #{tpu_custom_call.1} parent=11 // pred_check
          %p170 = pneg %p66
        $region14: #{tpu_custom_call.1} parent=11 // pred_check_branch
          %172 = sbr.rel (%p170) target = $region16
        $region15: #{tpu_custom_call.1} parent=11 // pred_region
          %s174 = ssub.s32 12288, 12288
          %175 = vsyncadd [#allocation6], %s174
          %s176 = sshll.u32 [#allocation5], 4
          %s177 = int_to_ptr.vmem [resolvable:$true] %s176
          %182 = dma.hbm_to_vmem [thread:$0]  %s1, 12288, %s177, [#allocation6], 768, 768, 48
        $region16: #{tpu_custom_call.1} parent=11 // pred_fallthru
          _
        // Predicated region
        $region17: #{tpu_custom_call.1} parent=11 // pred_check
          %p183 = pneg %p87
        $region18: #{tpu_custom_call.1} parent=11 // pred_check_branch
          %185 = sbr.rel (%p183) target = $region20
        $region19: #{tpu_custom_call.1} parent=11 // pred_region
          %s187 = ssub.s32 16384, 16384
          %188 = vsyncadd [#allocation6], %s187
          %s189 = sshll.u32 [#allocation7], 4
          %s190 = int_to_ptr.vmem [resolvable:$true] %s189
          %195 = dma.hbm_to_vmem [thread:$0]  %s2, 16384, %s190, [#allocation6], 256, 256, 16
        $region20: #{tpu_custom_call.1} parent=11 // pred_fallthru
          _
        // Predicated region
        $region21: #{tpu_custom_call.1} parent=11 // pred_check
          %p196 = pneg %p108
        $region22: #{tpu_custom_call.1} parent=11 // pred_check_branch
          %198 = sbr.rel (%p196) target = $region24
        $region23: #{tpu_custom_call.1} parent=11 // pred_region
          %s200 = ssub.s32 10240, 10240
          %201 = vsyncadd [#allocation9], %s200
          %s202 = sshll.u32 [#allocation8], 4
          %s203 = int_to_ptr.vmem [resolvable:$true] %s202
          %208 = dma.hbm_to_vmem [thread:$0]  %s3, 10240, %s203, [#allocation9], 320, 320, 20
        $region24: #{tpu_custom_call.1} parent=11 // pred_fallthru
          _
        // Predicated region
        $region25: #{tpu_custom_call.1} parent=11 // pred_check
          %p209 = pneg %p129
        $region26: #{tpu_custom_call.1} parent=11 // pred_check_branch
          %211 = sbr.rel (%p209) target = $region28
        $region27: #{tpu_custom_call.1} parent=11 // pred_region
          %s213 = ssub.s32 592, 592
          %214 = vsyncadd [#allocation9], %s213
          %s216 = sshll.u32 [#allocation10], 4
          %s217 = int_to_ptr.vmem [resolvable:$true] %s216
          %219 = dma.hbm_to_vmem [thread:$0]  %s4, 592, %s217, [#allocation9]
        $region28: #{tpu_custom_call.1} parent=11 // pred_fallthru
          _
      $region12: #{tpu_custom_call.1} parent=5 // pred_fallthru
        _
      %p220 = scmp.lt.s32.totalorder %s19, 2
      // Predicated region
      $region29: #{tpu_custom_call.1} parent=5 // pred_check
        %p221 = pneg %p220
      $region30: #{tpu_custom_call.1} parent=5 // pred_check_branch
        %223 = sbr.rel (%p221) target = $region32
      $region31: #{tpu_custom_call.1} parent=5 // pred_region
        // Predicated region
        $region33: #{tpu_custom_call.1} parent=31 // pred_check
          %p224 = pneg %p39
        $region34: #{tpu_custom_call.1} parent=31 // pred_check_branch
          %226 = sbr.rel (%p224) target = $region36
        $region35: #{tpu_custom_call.1} parent=31 // pred_region
          %s227 = sand.u32 %s29, 1
          %s228 = scalar_lea.sflag [#allocation3], %s227
          %s229 = sand.u32 %s29, 1
          %s230 = smul.addr %s229, 8
          %s231 = scalar_lea.vmem [#allocation2], %s230
          %s233 = ssub.s32 128, 128
          %234 = vsyncadd %s228, %s233
          %s235 = smul.addr %s19, 128
          %s236 = scalar_lea.hbm %s0, %s235
          %s238 = sshll.u32 %s231, 4
          %s239 = int_to_ptr.vmem [resolvable:$true] %s238
          %241 = dma.hbm_to_vmem [thread:$0]  %s236, 128, %s239, %s228
        $region36: #{tpu_custom_call.1} parent=31 // pred_fallthru
          _
      $region32: #{tpu_custom_call.1} parent=5 // pred_fallthru
        _
      %p242 = scmp.le.s32.totalorder 1, %s19
      %p243 = scmp.lt.s32.totalorder %s19, 3
      %p244 = pnand %p242, %p243
      %p245 = pneg %p244
      // Predicated region
      $region37: #{tpu_custom_call.1} parent=5 // pred_check
        _
      $region38: #{tpu_custom_call.1} parent=5 // pred_check_branch
        %247 = sbr.rel (%p244) target = $region40
      $region39: #{tpu_custom_call.1} parent=5 // pred_region
        %s248 = ssub.s32 %s19, 1
        %s249 = sand.u32 %s32, 1
        %s250 = scalar_lea.sflag [#allocation3], %s249
        %s251 = sand.u32 %s32, 1
        %s252 = smul.addr %s251, 8
        %s253 = scalar_lea.vmem [#allocation2], %s252
        // Predicated region
        $region41: #{tpu_custom_call.1} parent=39 // pred_check
          %p254 = pneg %p45
        $region42: #{tpu_custom_call.1} parent=39 // pred_check_branch
          %256 = sbr.rel (%p254) target = $region44
        $region43: #{tpu_custom_call.1} parent=39 // pred_region
          %257 = dma.done %s250, 128
        $region44: #{tpu_custom_call.1} parent=39 // pred_fallthru
          _
        // Predicated region
        $region45: #{tpu_custom_call.1} parent=39 // pred_check
          %p258 = pneg %p66
        $region46: #{tpu_custom_call.1} parent=39 // pred_check_branch
          %260 = sbr.rel (%p258) target = $region48
        $region47: #{tpu_custom_call.1} parent=39 // pred_region
          %261 = dma.done [#allocation6], 12288
        $region48: #{tpu_custom_call.1} parent=39 // pred_fallthru
          _
        // Predicated region
        $region49: #{tpu_custom_call.1} parent=39 // pred_check
          %p262 = pneg %p87
        $region50: #{tpu_custom_call.1} parent=39 // pred_check_branch
          %264 = sbr.rel (%p262) target = $region52
        $region51: #{tpu_custom_call.1} parent=39 // pred_region
          %265 = dma.done [#allocation6], 16384
        $region52: #{tpu_custom_call.1} parent=39 // pred_fallthru
          _
        // Predicated region
        $region53: #{tpu_custom_call.1} parent=39 // pred_check
          %p266 = pneg %p108
        $region54: #{tpu_custom_call.1} parent=39 // pred_check_branch
          %268 = sbr.rel (%p266) target = $region56
        $region55: #{tpu_custom_call.1} parent=39 // pred_region
          %269 = dma.done [#allocation9], 10240
        $region56: #{tpu_custom_call.1} parent=39 // pred_fallthru
          _
        // Predicated region
        $region57: #{tpu_custom_call.1} parent=39 // pred_check
          %p270 = pneg %p129
        $region58: #{tpu_custom_call.1} parent=39 // pred_check_branch
          %272 = sbr.rel (%p270) target = $region60
        $region59: #{tpu_custom_call.1} parent=39 // pred_region
          %273 = dma.done [#allocation9], 592
        $region60: #{tpu_custom_call.1} parent=39 // pred_fallthru
          _
        %s274 = sand.u32 %s32, 1
        %s275 = scalar_lea.sflag [#allocation3], %s274
        %s276 = sand.u32 %s32, 1
        %s277 = smul.addr %s276, 8
        %s278 = scalar_lea.vmem [#allocation2], %s277
        %p279 = pneg %p45
        %p280 = pneg %p42
        %p281 = pneg %p66
        %p282 = pneg %p63
        %p283 = pneg %p87
        %p284 = pneg %p84
        %p285 = pneg %p108
        %p286 = pneg %p105
        %p287 = pneg %p129
        %p288 = pneg %p126
        %p289 = pneg %p155
        %p290 = pneg %p152
        %s291 = sand.u32 %s142, 1
        %s292 = scalar_lea.sflag [#allocation4], %s291
        %s293 = sand.u32 %s142, 1
        %s294 = smul.addr %s293, 8
        %s295 = scalar_lea.vmem [#allocation11], %s294
        %v297 = vld [vmem:[%s253] sm:$0xff]
        %v298 = vpack.c.bf16 %v297, %v297
        %v299 = vld [vmem:[#allocation5] sm:$0xff]
        %v300 = vld [vmem:[#allocation5 + $0x8] sm:$0xff]
        %v301 = vld [vmem:[#allocation5 + $0x10] sm:$0xff]
        %v302 = vld [vmem:[#allocation5 + $0x18] sm:$0xff]
        %v303 = vld [vmem:[#allocation5 + $0x20] sm:$0xff]
        %v304 = vld [vmem:[#allocation5 + $0x28] sm:$0xff]
        %v305 = vld [vmem:[#allocation5 + $0x30] sm:$0xff]
        %v306 = vld [vmem:[#allocation5 + $0x38] sm:$0xff]
        %v307 = vld [vmem:[#allocation5 + $0x40] sm:$0xff]
        %v308 = vld [vmem:[#allocation5 + $0x48] sm:$0xff]
        %v309 = vld [vmem:[#allocation5 + $0x50] sm:$0xff]
        %v310 = vld [vmem:[#allocation5 + $0x58] sm:$0xff]
        %v311 = vld [vmem:[#allocation5 + $0x60] sm:$0xff]
        %v312 = vld [vmem:[#allocation5 + $0x68] sm:$0xff]
        %v313 = vld [vmem:[#allocation5 + $0x70] sm:$0xff]
        %v314 = vld [vmem:[#allocation5 + $0x78] sm:$0xff]
        %v315 = vld [vmem:[#allocation5 + $0x80] sm:$0xff]
        %v316 = vld [vmem:[#allocation5 + $0x88] sm:$0xff]
        %v317 = vld [vmem:[#allocation5 + $0x90] sm:$0xff]
        %v318 = vld [vmem:[#allocation5 + $0x98] sm:$0xff]
        %v319 = vld [vmem:[#allocation5 + $0xa0] sm:$0xff]
        %v320 = vld [vmem:[#allocation5 + $0xa8] sm:$0xff]
        %v321 = vld [vmem:[#allocation5 + $0xb0] sm:$0xff]
        %v322 = vld [vmem:[#allocation5 + $0xb8] sm:$0xff]
        %v323 = vld [vmem:[#allocation5 + $0xc0] sm:$0xff]
        %v324 = vld [vmem:[#allocation5 + $0xc8] sm:$0xff]
        %v325 = vld [vmem:[#allocation5 + $0xd0] sm:$0xff]
        %v326 = vld [vmem:[#allocation5 + $0xd8] sm:$0xff]
        %v327 = vld [vmem:[#allocation5 + $0xe0] sm:$0xff]
        %v328 = vld [vmem:[#allocation5 + $0xe8] sm:$0xff]
        %v329 = vld [vmem:[#allocation5 + $0xf0] sm:$0xff]
        %v330 = vld [vmem:[#allocation5 + $0xf8] sm:$0xff]
        %v331 = vld [vmem:[#allocation5 + $0x100] sm:$0xff]
        %v332 = vld [vmem:[#allocation5 + $0x108] sm:$0xff]
        %v333 = vld [vmem:[#allocation5 + $0x110] sm:$0xff]
        %v334 = vld [vmem:[#allocation5 + $0x118] sm:$0xff]
        %v335 = vld [vmem:[#allocation5 + $0x120] sm:$0xff]
        %v336 = vld [vmem:[#allocation5 + $0x128] sm:$0xff]
        %v337 = vld [vmem:[#allocation5 + $0x130] sm:$0xff]
        %v338 = vld [vmem:[#allocation5 + $0x138] sm:$0xff]
        %v339 = vld [vmem:[#allocation5 + $0x140] sm:$0xff]
        %v340 = vld [vmem:[#allocation5 + $0x148] sm:$0xff]
        %v341 = vld [vmem:[#allocation5 + $0x150] sm:$0xff]
        %v342 = vld [vmem:[#allocation5 + $0x158] sm:$0xff]
        %v343 = vld [vmem:[#allocation5 + $0x160] sm:$0xff]
        %v344 = vld [vmem:[#allocation5 + $0x168] sm:$0xff]
        %v345 = vld [vmem:[#allocation5 + $0x170] sm:$0xff]
        %v346 = vld [vmem:[#allocation5 + $0x178] sm:$0xff]
        %v347 = vld [vmem:[#allocation5 + $0x180] sm:$0xff]
        %v348 = vld [vmem:[#allocation5 + $0x188] sm:$0xff]
        %v349 = vld [vmem:[#allocation5 + $0x190] sm:$0xff]
        %v350 = vld [vmem:[#allocation5 + $0x198] sm:$0xff]
        %v351 = vld [vmem:[#allocation5 + $0x1a0] sm:$0xff]
        %v352 = vld [vmem:[#allocation5 + $0x1a8] sm:$0xff]
        %v353 = vld [vmem:[#allocation5 + $0x1b0] sm:$0xff]
        %v354 = vld [vmem:[#allocation5 + $0x1b8] sm:$0xff]
        %v355 = vld [vmem:[#allocation5 + $0x1c0] sm:$0xff]
        %v356 = vld [vmem:[#allocation5 + $0x1c8] sm:$0xff]
        %v357 = vld [vmem:[#allocation5 + $0x1d0] sm:$0xff]
        %v358 = vld [vmem:[#allocation5 + $0x1d8] sm:$0xff]
        %v359 = vld [vmem:[#allocation5 + $0x1e0] sm:$0xff]
        %v360 = vld [vmem:[#allocation5 + $0x1e8] sm:$0xff]
        %v361 = vld [vmem:[#allocation5 + $0x1f0] sm:$0xff]
        %v362 = vld [vmem:[#allocation5 + $0x1f8] sm:$0xff]
        %v363 = vld [vmem:[#allocation5 + $0x200] sm:$0xff]
        %v364 = vld [vmem:[#allocation5 + $0x208] sm:$0xff]
        %v365 = vld [vmem:[#allocation5 + $0x210] sm:$0xff]
        %v366 = vld [vmem:[#allocation5 + $0x218] sm:$0xff]
        %v367 = vld [vmem:[#allocation5 + $0x220] sm:$0xff]
        %v368 = vld [vmem:[#allocation5 + $0x228] sm:$0xff]
        %v369 = vld [vmem:[#allocation5 + $0x230] sm:$0xff]
        %v370 = vld [vmem:[#allocation5 + $0x238] sm:$0xff]
        %v371 = vld [vmem:[#allocation5 + $0x240] sm:$0xff]
        %v372 = vld [vmem:[#allocation5 + $0x248] sm:$0xff]
        %v373 = vld [vmem:[#allocation5 + $0x250] sm:$0xff]
        %v374 = vld [vmem:[#allocation5 + $0x258] sm:$0xff]
        %v375 = vld [vmem:[#allocation5 + $0x260] sm:$0xff]
        %v376 = vld [vmem:[#allocation5 + $0x268] sm:$0xff]
        %v377 = vld [vmem:[#allocation5 + $0x270] sm:$0xff]
        %v378 = vld [vmem:[#allocation5 + $0x278] sm:$0xff]
        %v379 = vld [vmem:[#allocation5 + $0x280] sm:$0xff]
        %v380 = vld [vmem:[#allocation5 + $0x288] sm:$0xff]
        %v381 = vld [vmem:[#allocation5 + $0x290] sm:$0xff]
        %v382 = vld [vmem:[#allocation5 + $0x298] sm:$0xff]
        %v383 = vld [vmem:[#allocation5 + $0x2a0] sm:$0xff]
        %v384 = vld [vmem:[#allocation5 + $0x2a8] sm:$0xff]
        %v385 = vld [vmem:[#allocation5 + $0x2b0] sm:$0xff]
        %v386 = vld [vmem:[#allocation5 + $0x2b8] sm:$0xff]
        %v387 = vld [vmem:[#allocation5 + $0x2c0] sm:$0xff]
        %v388 = vld [vmem:[#allocation5 + $0x2c8] sm:$0xff]
        %v389 = vld [vmem:[#allocation5 + $0x2d0] sm:$0xff]
        %v390 = vld [vmem:[#allocation5 + $0x2d8] sm:$0xff]
        %v391 = vld [vmem:[#allocation5 + $0x2e0] sm:$0xff]
        %v392 = vld [vmem:[#allocation5 + $0x2e8] sm:$0xff]
        %v393 = vld [vmem:[#allocation5 + $0x2f0] sm:$0xff]
        %v394 = vld [vmem:[#allocation5 + $0x2f8] sm:$0xff]
        %v395 = vld [vmem:[#allocation10] sm:$0xff]
        %v396 = vld [vmem:[#allocation10 + $0x8] sm:$0xf]
        %v399 = vlaneseq
        %v400 = vshrl.u32 %v399, 7
        %v401 = vsub.s32 0, %v400
        %v402 = vrot.slane %v395, %v401
        %v403 = vlaneseq
        %v404 = vshrl.u32 %v403, 7
        %v405 = vsub.s32 1, %v404
        %v406 = vrot.slane %v395, %v405
        %v407 = vlaneseq
        %v408 = vshrl.u32 %v407, 7
        %v409 = vsub.s32 2, %v408
        %v410 = vrot.slane %v395, %v409
        %v411 = vlaneseq
        %v412 = vshrl.u32 %v411, 7
        %v413 = vsub.s32 3, %v412
        %v414 = vrot.slane %v395, %v413
        %v415 = vlaneseq
        %v416 = vshrl.u32 %v415, 7
        %v417 = vsub.s32 4, %v416
        %v418 = vrot.slane %v395, %v417
        %v419 = vlaneseq
        %v420 = vshrl.u32 %v419, 7
        %v421 = vsub.s32 5, %v420
        %v422 = vrot.slane %v395, %v421
        %v423 = vlaneseq
        %v424 = vshrl.u32 %v423, 7
        %v425 = vsub.s32 6, %v424
        %v426 = vrot.slane %v395, %v425
        %v427 = vlaneseq
        %v428 = vshrl.u32 %v427, 7
        %v429 = vsub.s32 7, %v428
        %v430 = vrot.slane %v395, %v429
        %v431 = vlaneseq
        %v432 = vshrl.u32 %v431, 7
        %v433 = vsub.s32 0, %v432
        %v434 = vrot.slane %v396, %v433
        %v435 = vlaneseq
        %v436 = vshrl.u32 %v435, 7
        %v437 = vsub.s32 1, %v436
        %v438 = vrot.slane %v396, %v437
        %v439 = vlaneseq
        %v440 = vshrl.u32 %v439, 7
        %v441 = vsub.s32 2, %v440
        %v442 = vrot.slane %v396, %v441
        %v443 = vlaneseq
        %v444 = vshrl.u32 %v443, 7
        %v445 = vsub.s32 3, %v444
        %v446 = vrot.slane %v396, %v445
        %v555 = vunpack.c.l.b16 %v299
        %v556 = vunpack.c.h.b16 %v299
        %v557 = vunpack.c.l.b16 %v300
        %v558 = vunpack.c.h.b16 %v300
        %v559 = vunpack.c.l.b16 %v301
        %v560 = vunpack.c.h.b16 %v301
        %v561 = vunpack.c.l.b16 %v302
        %v562 = vunpack.c.h.b16 %v302
        %v563 = vunpack.c.l.b16 %v303
        %v564 = vunpack.c.h.b16 %v303
        %v565 = vunpack.c.l.b16 %v304
        %v566 = vunpack.c.h.b16 %v304
        %v567 = vunpack.c.l.b16 %v305
        %v568 = vunpack.c.h.b16 %v305
        %v569 = vunpack.c.l.b16 %v306
        %v570 = vunpack.c.h.b16 %v306
        %v571 = vunpack.c.l.b16 %v307
        %v572 = vunpack.c.h.b16 %v307
        %v573 = vunpack.c.l.b16 %v308
        %v574 = vunpack.c.h.b16 %v308
        %v575 = vunpack.c.l.b16 %v309
        %v576 = vunpack.c.h.b16 %v309
        %v577 = vunpack.c.l.b16 %v310
        %v578 = vunpack.c.h.b16 %v310
        %v579 = vunpack.c.l.b16 %v311
        %v580 = vunpack.c.h.b16 %v311
        %v581 = vunpack.c.l.b16 %v312
        %v582 = vunpack.c.h.b16 %v312
        %v583 = vunpack.c.l.b16 %v313
        %v584 = vunpack.c.h.b16 %v313
        %v585 = vunpack.c.l.b16 %v314
        %v586 = vunpack.c.h.b16 %v314
        %v587 = vunpack.c.l.b16 %v315
        %v588 = vunpack.c.h.b16 %v315
        %v589 = vunpack.c.l.b16 %v316
        %v590 = vunpack.c.h.b16 %v316
        %v591 = vunpack.c.l.b16 %v317
        %v592 = vunpack.c.h.b16 %v317
        %v593 = vunpack.c.l.b16 %v318
        %v594 = vunpack.c.h.b16 %v318
        %v595 = vunpack.c.l.b16 %v319
        %v596 = vunpack.c.h.b16 %v319
        %v597 = vunpack.c.l.b16 %v320
        %v598 = vunpack.c.h.b16 %v320
        %v599 = vunpack.c.l.b16 %v321
        %v600 = vunpack.c.h.b16 %v321
        %v601 = vunpack.c.l.b16 %v322
        %v602 = vunpack.c.h.b16 %v322
        %v603 = vunpack.c.l.b16 %v323
        %v604 = vunpack.c.h.b16 %v323
        %v605 = vunpack.c.l.b16 %v324
        %v606 = vunpack.c.h.b16 %v324
        %v607 = vunpack.c.l.b16 %v325
        %v608 = vunpack.c.h.b16 %v325
        %v609 = vunpack.c.l.b16 %v326
        %v610 = vunpack.c.h.b16 %v326
        %v611 = vunpack.c.l.b16 %v327
        %v612 = vunpack.c.h.b16 %v327
        %v613 = vunpack.c.l.b16 %v328
        %v614 = vunpack.c.h.b16 %v328
        %v615 = vunpack.c.l.b16 %v329
        %v616 = vunpack.c.h.b16 %v329
        %v617 = vunpack.c.l.b16 %v330
        %v618 = vunpack.c.h.b16 %v330
        %v619 = vunpack.c.l.b16 %v331
        %v620 = vunpack.c.h.b16 %v331
        %v621 = vunpack.c.l.b16 %v332
        %v622 = vunpack.c.h.b16 %v332
        %v623 = vunpack.c.l.b16 %v333
        %v624 = vunpack.c.h.b16 %v333
        %v625 = vunpack.c.l.b16 %v334
        %v626 = vunpack.c.h.b16 %v334
        %v627 = vunpack.c.l.b16 %v335
        %v628 = vunpack.c.h.b16 %v335
        %v629 = vunpack.c.l.b16 %v336
        %v630 = vunpack.c.h.b16 %v336
        %v631 = vunpack.c.l.b16 %v337
        %v632 = vunpack.c.h.b16 %v337
        %v633 = vunpack.c.l.b16 %v338
        %v634 = vunpack.c.h.b16 %v338
        %v635 = vunpack.c.l.b16 %v339
        %v636 = vunpack.c.h.b16 %v339
        %v637 = vunpack.c.l.b16 %v340
        %v638 = vunpack.c.h.b16 %v340
        %v639 = vunpack.c.l.b16 %v341
        %v640 = vunpack.c.h.b16 %v341
        %v641 = vunpack.c.l.b16 %v342
        %v642 = vunpack.c.h.b16 %v342
        %v643 = vunpack.c.l.b16 %v343
        %v644 = vunpack.c.h.b16 %v343
        %v645 = vunpack.c.l.b16 %v344
        %v646 = vunpack.c.h.b16 %v344
        %v647 = vunpack.c.l.b16 %v345
        %v648 = vunpack.c.h.b16 %v345
        %v649 = vunpack.c.l.b16 %v346
        %v650 = vunpack.c.h.b16 %v346
        %v651 = vunpack.c.l.b16 %v347
        %v652 = vunpack.c.h.b16 %v347
        %v653 = vunpack.c.l.b16 %v348
        %v654 = vunpack.c.h.b16 %v348
        %v655 = vunpack.c.l.b16 %v349
        %v656 = vunpack.c.h.b16 %v349
        %v657 = vunpack.c.l.b16 %v350
        %v658 = vunpack.c.h.b16 %v350
        %v659 = vunpack.c.l.b16 %v351
        %v660 = vunpack.c.h.b16 %v351
        %v661 = vunpack.c.l.b16 %v352
        %v662 = vunpack.c.h.b16 %v352
        %v663 = vunpack.c.l.b16 %v353
        %v664 = vunpack.c.h.b16 %v353
        %v665 = vunpack.c.l.b16 %v354
        %v666 = vunpack.c.h.b16 %v354
        %v667 = vunpack.c.l.b16 %v355
        %v668 = vunpack.c.h.b16 %v355
        %v669 = vunpack.c.l.b16 %v356
        %v670 = vunpack.c.h.b16 %v356
        %v671 = vunpack.c.l.b16 %v357
        %v672 = vunpack.c.h.b16 %v357
        %v673 = vunpack.c.l.b16 %v358
        %v674 = vunpack.c.h.b16 %v358
        %v675 = vunpack.c.l.b16 %v359
        %v676 = vunpack.c.h.b16 %v359
        %v677 = vunpack.c.l.b16 %v360
        %v678 = vunpack.c.h.b16 %v360
        %v679 = vunpack.c.l.b16 %v361
        %v680 = vunpack.c.h.b16 %v361
        %v681 = vunpack.c.l.b16 %v362
        %v682 = vunpack.c.h.b16 %v362
        %v683 = vunpack.c.l.b16 %v363
        %v684 = vunpack.c.h.b16 %v363
        %v685 = vunpack.c.l.b16 %v364
        %v686 = vunpack.c.h.b16 %v364
        %v687 = vunpack.c.l.b16 %v365
        %v688 = vunpack.c.h.b16 %v365
        %v689 = vunpack.c.l.b16 %v366
        %v690 = vunpack.c.h.b16 %v366
        %v691 = vunpack.c.l.b16 %v367
        %v692 = vunpack.c.h.b16 %v367
        %v693 = vunpack.c.l.b16 %v368
        %v694 = vunpack.c.h.b16 %v368
        %v695 = vunpack.c.l.b16 %v369
        %v696 = vunpack.c.h.b16 %v369
        %v697 = vunpack.c.l.b16 %v370
        %v698 = vunpack.c.h.b16 %v370
        %v699 = vunpack.c.l.b16 %v371
        %v700 = vunpack.c.h.b16 %v371
        %v701 = vunpack.c.l.b16 %v372
        %v702 = vunpack.c.h.b16 %v372
        %v703 = vunpack.c.l.b16 %v373
        %v704 = vunpack.c.h.b16 %v373
        %v705 = vunpack.c.l.b16 %v374
        %v706 = vunpack.c.h.b16 %v374
        %v707 = vunpack.c.l.b16 %v375
        %v708 = vunpack.c.h.b16 %v375
        %v709 = vunpack.c.l.b16 %v376
        %v710 = vunpack.c.h.b16 %v376
        %v711 = vunpack.c.l.b16 %v377
        %v712 = vunpack.c.h.b16 %v377
        %v713 = vunpack.c.l.b16 %v378
        %v714 = vunpack.c.h.b16 %v378
        %v715 = vunpack.c.l.b16 %v379
        %v716 = vunpack.c.h.b16 %v379
        %v717 = vunpack.c.l.b16 %v380
        %v718 = vunpack.c.h.b16 %v380
        %v719 = vunpack.c.l.b16 %v381
        %v720 = vunpack.c.h.b16 %v381
        %v721 = vunpack.c.l.b16 %v382
        %v722 = vunpack.c.h.b16 %v382
        %v723 = vunpack.c.l.b16 %v383
        %v724 = vunpack.c.h.b16 %v383
        %v725 = vunpack.c.l.b16 %v384
        %v726 = vunpack.c.h.b16 %v384
        %v727 = vunpack.c.l.b16 %v385
        %v728 = vunpack.c.h.b16 %v385
        %v729 = vunpack.c.l.b16 %v386
        %v730 = vunpack.c.h.b16 %v386
        %v731 = vunpack.c.l.b16 %v387
        %v732 = vunpack.c.h.b16 %v387
        %v733 = vunpack.c.l.b16 %v388
        %v734 = vunpack.c.h.b16 %v388
        %v735 = vunpack.c.l.b16 %v389
        %v736 = vunpack.c.h.b16 %v389
        %v737 = vunpack.c.l.b16 %v390
        %v738 = vunpack.c.h.b16 %v390
        %v739 = vunpack.c.l.b16 %v391
        %v740 = vunpack.c.h.b16 %v391
        %v741 = vunpack.c.l.b16 %v392
        %v742 = vunpack.c.h.b16 %v392
        %v743 = vunpack.c.l.b16 %v393
        %v744 = vunpack.c.h.b16 %v393
        %v745 = vunpack.c.l.b16 %v394
        %v746 = vunpack.c.h.b16 %v394
        %v747 = vpack.c.b16 %v567, %v555
        %v748 = vpack.c.b16 %v568, %v556
        %v749 = vpack.c.b16 %v569, %v557
        %v750 = vpack.c.b16 %v570, %v558
        %v751 = vpack.c.b16 %v571, %v559
        %v752 = vpack.c.b16 %v572, %v560
        %v753 = vpack.c.b16 %v573, %v561
        %v754 = vpack.c.b16 %v574, %v562
        %v755 = vpack.c.b16 %v575, %v563
        %v756 = vpack.c.b16 %v576, %v564
        %v757 = vpack.c.b16 %v577, %v565
        %v758 = vpack.c.b16 %v578, %v566
        %v759 = vpack.c.b16 %v591, %v579
        %v760 = vpack.c.b16 %v592, %v580
        %v761 = vpack.c.b16 %v593, %v581
        %v762 = vpack.c.b16 %v594, %v582
        %v763 = vpack.c.b16 %v595, %v583
        %v764 = vpack.c.b16 %v596, %v584
        %v765 = vpack.c.b16 %v597, %v585
        %v766 = vpack.c.b16 %v598, %v586
        %v767 = vpack.c.b16 %v599, %v587
        %v768 = vpack.c.b16 %v600, %v588
        %v769 = vpack.c.b16 %v601, %v589
        %v770 = vpack.c.b16 %v602, %v590
        %v771 = vpack.c.b16 %v615, %v603
        %v772 = vpack.c.b16 %v616, %v604
        %v773 = vpack.c.b16 %v617, %v605
        %v774 = vpack.c.b16 %v618, %v606
        %v775 = vpack.c.b16 %v619, %v607
        %v776 = vpack.c.b16 %v620, %v608
        %v777 = vpack.c.b16 %v621, %v609
        %v778 = vpack.c.b16 %v622, %v610
        %v779 = vpack.c.b16 %v623, %v611
        %v780 = vpack.c.b16 %v624, %v612
        %v781 = vpack.c.b16 %v625, %v613
        %v782 = vpack.c.b16 %v626, %v614
        %v783 = vpack.c.b16 %v639, %v627
        %v784 = vpack.c.b16 %v640, %v628
        %v785 = vpack.c.b16 %v641, %v629
        %v786 = vpack.c.b16 %v642, %v630
        %v787 = vpack.c.b16 %v643, %v631
        %v788 = vpack.c.b16 %v644, %v632
        %v789 = vpack.c.b16 %v645, %v633
        %v790 = vpack.c.b16 %v646, %v634
        %v791 = vpack.c.b16 %v647, %v635
        %v792 = vpack.c.b16 %v648, %v636
        %v793 = vpack.c.b16 %v649, %v637
        %v794 = vpack.c.b16 %v650, %v638
        %v795 = vpack.c.b16 %v663, %v651
        %v796 = vpack.c.b16 %v664, %v652
        %v797 = vpack.c.b16 %v665, %v653
        %v798 = vpack.c.b16 %v666, %v654
        %v799 = vpack.c.b16 %v667, %v655
        %v800 = vpack.c.b16 %v668, %v656
        %v801 = vpack.c.b16 %v669, %v657
        %v802 = vpack.c.b16 %v670, %v658
        %v803 = vpack.c.b16 %v671, %v659
        %v804 = vpack.c.b16 %v672, %v660
        %v805 = vpack.c.b16 %v673, %v661
        %v806 = vpack.c.b16 %v674, %v662
        %v807 = vpack.c.b16 %v687, %v675
        %v808 = vpack.c.b16 %v688, %v676
        %v809 = vpack.c.b16 %v689, %v677
        %v810 = vpack.c.b16 %v690, %v678
        %v811 = vpack.c.b16 %v691, %v679
        %v812 = vpack.c.b16 %v692, %v680
        %v813 = vpack.c.b16 %v693, %v681
        %v814 = vpack.c.b16 %v694, %v682
        %v815 = vpack.c.b16 %v695, %v683
        %v816 = vpack.c.b16 %v696, %v684
        %v817 = vpack.c.b16 %v697, %v685
        %v818 = vpack.c.b16 %v698, %v686
        %v819 = vpack.c.b16 %v711, %v699
        %v820 = vpack.c.b16 %v712, %v700
        %v821 = vpack.c.b16 %v713, %v701
        %v822 = vpack.c.b16 %v714, %v702
        %v823 = vpack.c.b16 %v715, %v703
        %v824 = vpack.c.b16 %v716, %v704
        %v825 = vpack.c.b16 %v717, %v705
        %v826 = vpack.c.b16 %v718, %v706
        %v827 = vpack.c.b16 %v719, %v707
        %v828 = vpack.c.b16 %v720, %v708
        %v829 = vpack.c.b16 %v721, %v709
        %v830 = vpack.c.b16 %v722, %v710
        %v831 = vpack.c.b16 %v735, %v723
        %v832 = vpack.c.b16 %v736, %v724
        %v833 = vpack.c.b16 %v737, %v725
        %v834 = vpack.c.b16 %v738, %v726
        %v835 = vpack.c.b16 %v739, %v727
        %v836 = vpack.c.b16 %v740, %v728
        %v837 = vpack.c.b16 %v741, %v729
        %v838 = vpack.c.b16 %v742, %v730
        %v839 = vpack.c.b16 %v743, %v731
        %v840 = vpack.c.b16 %v744, %v732
        %v841 = vpack.c.b16 %v745, %v733
        %v842 = vpack.c.b16 %v746, %v734
        %939 = vmatprep.subr.bf16.mxu0 %v832
        %940 = vmatpush1.bf16.msra.mxu0 %v831
        %941 = vmatprep.subr.bf16.mxu0 %v820
        %942 = vmatpush1.bf16.msra.mxu0 %v819
        %943 = vmatprep.subr.bf16.mxu0 %v808
        %944 = vmatpush1.bf16.msra.mxu0 %v807
        %945 = vmatprep.subr.bf16.mxu0 %v796
        %946 = vmatpush1.bf16.msra.mxu0 %v795
        %947 = vmatprep.subr.bf16.mxu0 %v784
        %948 = vmatpush1.bf16.msra.mxu0 %v783
        %949 = vmatprep.subr.bf16.mxu0 %v772
        %950 = vmatpush1.bf16.msra.mxu0 %v771
        %951 = vmatprep.subr.bf16.mxu0 %v760
        %952 = vmatpush1.bf16.msra.mxu0 %v759
        %953 = vmatprep.subr.bf16.mxu0 %v748
        %954 = vmatpush1.bf16.msra.mxu0 %v747
        %955 = vmatprep.subr.bf16.mxu0 0
        %956 = vmatpush2.bf16.msra.mxu0 0
        %957 = vmatprep.subr.bf16.mxu0 0
        %958 = vmatpush2.bf16.msra.mxu0 0
        %959 = vmatprep.subr.bf16.mxu0 0
        %960 = vmatpush2.bf16.msra.mxu0 0
        %961 = vmatprep.subr.bf16.mxu0 0
        %962 = vmatpush2.bf16.msra.mxu0 0
        %963 = vmatprep.subr.bf16.mxu0 0
        %964 = vmatpush2.bf16.msra.mxu0 0
        %965 = vmatprep.subr.bf16.mxu0 0
        %966 = vmatpush2.bf16.msra.mxu0 0
        %967 = vmatprep.subr.bf16.mxu0 0
        %968 = vmatpush2.bf16.msra.mxu0 0
        %969 = vmatprep.subr.bf16.mxu0 0
        %970 = vmatpush2.bf16.msra.mxu0 0
        %971 = vmatprep.mubr.bf16.mxu0 0
        %972 = vmatmul.mubr.bf16.gmra.mxu0 %v298
        %v973 = vpop.f32.mrf.mxu0
        %v974 = vadd.f32 %v402, %v973
        %v975 = vpop.f32.mrf.mxu0
        %v976 = vadd.f32 %v406, %v975
        %v977 = vpop.f32.mrf.mxu0
        %v978 = vpop.f32.mrf.mxu0
        %979 = vdwg.mxu0
        %980 = vmatprep.subr.bf16.mxu0 %v834
        %981 = vmatpush1.bf16.msra.mxu0 %v833
        %982 = vmatprep.subr.bf16.mxu0 %v822
        %983 = vmatpush1.bf16.msra.mxu0 %v821
        %984 = vmatprep.subr.bf16.mxu0 %v810
        %985 = vmatpush1.bf16.msra.mxu0 %v809
        %986 = vmatprep.subr.bf16.mxu0 %v798
        %987 = vmatpush1.bf16.msra.mxu0 %v797
        %988 = vmatprep.subr.bf16.mxu0 %v786
        %989 = vmatpush1.bf16.msra.mxu0 %v785
        %990 = vmatprep.subr.bf16.mxu0 %v774
        %991 = vmatpush1.bf16.msra.mxu0 %v773
        %992 = vmatprep.subr.bf16.mxu0 %v762
        %993 = vmatpush1.bf16.msra.mxu0 %v761
        %994 = vmatprep.subr.bf16.mxu0 %v750
        %995 = vmatpush1.bf16.msra.mxu0 %v749
        %996 = vmatprep.subr.bf16.mxu0 0
        %997 = vmatpush2.bf16.msra.mxu0 0
        %998 = vmatprep.subr.bf16.mxu0 0
        %999 = vmatpush2.bf16.msra.mxu0 0
        %1000 = vmatprep.subr.bf16.mxu0 0
        %1001 = vmatpush2.bf16.msra.mxu0 0
        %1002 = vmatprep.subr.bf16.mxu0 0
        %1003 = vmatpush2.bf16.msra.mxu0 0
        %1004 = vmatprep.subr.bf16.mxu0 0
        %1005 = vmatpush2.bf16.msra.mxu0 0
        %1006 = vmatprep.subr.bf16.mxu0 0
        %1007 = vmatpush2.bf16.msra.mxu0 0
        %1008 = vmatprep.subr.bf16.mxu0 0
        %1009 = vmatpush2.bf16.msra.mxu0 0
        %1010 = vmatprep.subr.bf16.mxu0 0
        %1011 = vmatpush2.bf16.msra.mxu0 0
        %1012 = vmatprep.mubr.bf16.mxu0 0
        %1013 = vmatmul.mubr.bf16.gmra.mxu0 %v298
        %v1014 = vpop.f32.mrf.mxu0
        %v1015 = vadd.f32 %v410, %v1014
        %v1016 = vpop.f32.mrf.mxu0
        %v1017 = vadd.f32 %v414, %v1016
        %v1018 = vpop.f32.mrf.mxu0
        %v1019 = vpop.f32.mrf.mxu0
        %1020 = vdwg.mxu0
        %1021 = vmatprep.subr.bf16.mxu0 %v836
        %1022 = vmatpush1.bf16.msra.mxu0 %v835
        %1023 = vmatprep.subr.bf16.mxu0 %v824
        %1024 = vmatpush1.bf16.msra.mxu0 %v823
        %1025 = vmatprep.subr.bf16.mxu0 %v812
        %1026 = vmatpush1.bf16.msra.mxu0 %v811
        %1027 = vmatprep.subr.bf16.mxu0 %v800
        %1028 = vmatpush1.bf16.msra.mxu0 %v799
        %1029 = vmatprep.subr.bf16.mxu0 %v788
        %1030 = vmatpush1.bf16.msra.mxu0 %v787
        %1031 = vmatprep.subr.bf16.mxu0 %v776
        %1032 = vmatpush1.bf16.msra.mxu0 %v775
        %1033 = vmatprep.subr.bf16.mxu0 %v764
        %1034 = vmatpush1.bf16.msra.mxu0 %v763
        %1035 = vmatprep.subr.bf16.mxu0 %v752
        %1036 = vmatpush1.bf16.msra.mxu0 %v751
        %1037 = vmatprep.subr.bf16.mxu0 0
        %1038 = vmatpush2.bf16.msra.mxu0 0
        %1039 = vmatprep.subr.bf16.mxu0 0
        %1040 = vmatpush2.bf16.msra.mxu0 0
        %1041 = vmatprep.subr.bf16.mxu0 0
        %1042 = vmatpush2.bf16.msra.mxu0 0
        %1043 = vmatprep.subr.bf16.mxu0 0
        %1044 = vmatpush2.bf16.msra.mxu0 0
        %1045 = vmatprep.subr.bf16.mxu0 0
        %1046 = vmatpush2.bf16.msra.mxu0 0
        %1047 = vmatprep.subr.bf16.mxu0 0
        %1048 = vmatpush2.bf16.msra.mxu0 0
        %1049 = vmatprep.subr.bf16.mxu0 0
        %1050 = vmatpush2.bf16.msra.mxu0 0
        %1051 = vmatprep.subr.bf16.mxu0 0
        %1052 = vmatpush2.bf16.msra.mxu0 0
        %1053 = vmatprep.mubr.bf16.mxu0 0
        %1054 = vmatmul.mubr.bf16.gmra.mxu0 %v298
        %v1055 = vpop.f32.mrf.mxu0
        %v1056 = vadd.f32 %v418, %v1055
        %v1057 = vpop.f32.mrf.mxu0
        %v1058 = vadd.f32 %v422, %v1057
        %v1059 = vpop.f32.mrf.mxu0
        %v1060 = vpop.f32.mrf.mxu0
        %1061 = vdwg.mxu0
        %1062 = vmatprep.subr.bf16.mxu0 %v838
        %1063 = vmatpush1.bf16.msra.mxu0 %v837
        %1064 = vmatprep.subr.bf16.mxu0 %v826
        %1065 = vmatpush1.bf16.msra.mxu0 %v825
        %1066 = vmatprep.subr.bf16.mxu0 %v814
        %1067 = vmatpush1.bf16.msra.mxu0 %v813
        %1068 = vmatprep.subr.bf16.mxu0 %v802
        %1069 = vmatpush1.bf16.msra.mxu0 %v801
        %1070 = vmatprep.subr.bf16.mxu0 %v790
        %1071 = vmatpush1.bf16.msra.mxu0 %v789
        %1072 = vmatprep.subr.bf16.mxu0 %v778
        %1073 = vmatpush1.bf16.msra.mxu0 %v777
        %1074 = vmatprep.subr.bf16.mxu0 %v766
        %1075 = vmatpush1.bf16.msra.mxu0 %v765
        %1076 = vmatprep.subr.bf16.mxu0 %v754
        %1077 = vmatpush1.bf16.msra.mxu0 %v753
        %1078 = vmatprep.subr.bf16.mxu0 0
        %1079 = vmatpush2.bf16.msra.mxu0 0
        %1080 = vmatprep.subr.bf16.mxu0 0
        %1081 = vmatpush2.bf16.msra.mxu0 0
        %1082 = vmatprep.subr.bf16.mxu0 0
        %1083 = vmatpush2.bf16.msra.mxu0 0
        %1084 = vmatprep.subr.bf16.mxu0 0
        %1085 = vmatpush2.bf16.msra.mxu0 0
        %1086 = vmatprep.subr.bf16.mxu0 0
        %1087 = vmatpush2.bf16.msra.mxu0 0
        %1088 = vmatprep.subr.bf16.mxu0 0
        %1089 = vmatpush2.bf16.msra.mxu0 0
        %1090 = vmatprep.subr.bf16.mxu0 0
        %1091 = vmatpush2.bf16.msra.mxu0 0
        %1092 = vmatprep.subr.bf16.mxu0 0
        %1093 = vmatpush2.bf16.msra.mxu0 0
        %1094 = vmatprep.mubr.bf16.mxu0 0
        %1095 = vmatmul.mubr.bf16.gmra.mxu0 %v298
        %v1096 = vpop.f32.mrf.mxu0
        %v1097 = vadd.f32 %v426, %v1096
        %v1098 = vpop.f32.mrf.mxu0
        %v1099 = vadd.f32 %v430, %v1098
        %v1100 = vpop.f32.mrf.mxu0
        %v1101 = vpop.f32.mrf.mxu0
        %1102 = vdwg.mxu0
        %1103 = vmatprep.subr.bf16.mxu0 %v840
        %1104 = vmatpush1.bf16.msra.mxu0 %v839
        %1105 = vmatprep.subr.bf16.mxu0 %v828
        %1106 = vmatpush1.bf16.msra.mxu0 %v827
        %1107 = vmatprep.subr.bf16.mxu0 %v816
        %1108 = vmatpush1.bf16.msra.mxu0 %v815
        %1109 = vmatprep.subr.bf16.mxu0 %v804
        %1110 = vmatpush1.bf16.msra.mxu0 %v803
        %1111 = vmatprep.subr.bf16.mxu0 %v792
        %1112 = vmatpush1.bf16.msra.mxu0 %v791
        %1113 = vmatprep.subr.bf16.mxu0 %v780
        %1114 = vmatpush1.bf16.msra.mxu0 %v779
        %1115 = vmatprep.subr.bf16.mxu0 %v768
        %1116 = vmatpush1.bf16.msra.mxu0 %v767
        %1117 = vmatprep.subr.bf16.mxu0 %v756
        %1118 = vmatpush1.bf16.msra.mxu0 %v755
        %1119 = vmatprep.subr.bf16.mxu0 0
        %1120 = vmatpush2.bf16.msra.mxu0 0
        %1121 = vmatprep.subr.bf16.mxu0 0
        %1122 = vmatpush2.bf16.msra.mxu0 0
        %1123 = vmatprep.subr.bf16.mxu0 0
        %1124 = vmatpush2.bf16.msra.mxu0 0
        %1125 = vmatprep.subr.bf16.mxu0 0
        %1126 = vmatpush2.bf16.msra.mxu0 0
        %1127 = vmatprep.subr.bf16.mxu0 0
        %1128 = vmatpush2.bf16.msra.mxu0 0
        %1129 = vmatprep.subr.bf16.mxu0 0
        %1130 = vmatpush2.bf16.msra.mxu0 0
        %1131 = vmatprep.subr.bf16.mxu0 0
        %1132 = vmatpush2.bf16.msra.mxu0 0
        %1133 = vmatprep.subr.bf16.mxu0 0
        %1134 = vmatpush2.bf16.msra.mxu0 0
        %1135 = vmatprep.mubr.bf16.mxu0 0
        %1136 = vmatmul.mubr.bf16.gmra.mxu0 %v298
        %v1137 = vpop.f32.mrf.mxu0
        %v1138 = vadd.f32 %v434, %v1137
        %v1139 = vpop.f32.mrf.mxu0
        %v1140 = vadd.f32 %v438, %v1139
        %v1141 = vpop.f32.mrf.mxu0
        %v1142 = vpop.f32.mrf.mxu0
        %1143 = vdwg.mxu0
        %1144 = vmatprep.subr.bf16.mxu0 %v842
        %1145 = vmatpush1.bf16.msra.mxu0 %v841
        %1146 = vmatprep.subr.bf16.mxu0 %v830
        %1147 = vmatpush1.bf16.msra.mxu0 %v829
        %1148 = vmatprep.subr.bf16.mxu0 %v818
        %1149 = vmatpush1.bf16.msra.mxu0 %v817
        %1150 = vmatprep.subr.bf16.mxu0 %v806
        %1151 = vmatpush1.bf16.msra.mxu0 %v805
        %1152 = vmatprep.subr.bf16.mxu0 %v794
        %1153 = vmatpush1.bf16.msra.mxu0 %v793
        %1154 = vmatprep.subr.bf16.mxu0 %v782
        %1155 = vmatpush1.bf16.msra.mxu0 %v781
        %1156 = vmatprep.subr.bf16.mxu0 %v770
        %1157 = vmatpush1.bf16.msra.mxu0 %v769
        %1158 = vmatprep.subr.bf16.mxu0 %v758
        %1159 = vmatpush1.bf16.msra.mxu0 %v757
        %1160 = vmatprep.subr.bf16.mxu0 0
        %1161 = vmatpush2.bf16.msra.mxu0 0
        %1162 = vmatprep.subr.bf16.mxu0 0
        %1163 = vmatpush2.bf16.msra.mxu0 0
        %1164 = vmatprep.subr.bf16.mxu0 0
        %1165 = vmatpush2.bf16.msra.mxu0 0
        %1166 = vmatprep.subr.bf16.mxu0 0
        %1167 = vmatpush2.bf16.msra.mxu0 0
        %1168 = vmatprep.subr.bf16.mxu0 0
        %1169 = vmatpush2.bf16.msra.mxu0 0
        %1170 = vmatprep.subr.bf16.mxu0 0
        %1171 = vmatpush2.bf16.msra.mxu0 0
        %1172 = vmatprep.subr.bf16.mxu0 0
        %1173 = vmatpush2.bf16.msra.mxu0 0
        %1174 = vmatprep.subr.bf16.mxu0 0
        %1175 = vmatpush2.bf16.msra.mxu0 0
        %1176 = vmatprep.mubr.bf16.mxu0 0
        %1177 = vmatmul.mubr.bf16.gmra.mxu0 %v298
        %v1178 = vpop.f32.mrf.mxu0
        %v1179 = vadd.f32 %v442, %v1178
        %v1180 = vpop.f32.mrf.mxu0
        %v1181 = vadd.f32 %v446, %v1180
        %v1182 = vpop.f32.mrf.mxu0
        %v1183 = vpop.f32.mrf.mxu0
        %1184 = vdwg.mxu0
        %v1185 = vxor.u32 %v974, 2147483648
        %v1186 = vxor.u32 %v976, 2147483648
        %v1187 = vxor.u32 %v1015, 2147483648
        %v1188 = vxor.u32 %v1017, 2147483648
        %v1189 = vmul.f32 %v1185, 1.442695
        %v1190 = vpow.pop %v1189
        %v1191 = vmul.f32 %v1186, 1.442695
        %v1192 = vpow.pop %v1191
        %v1193 = vmul.f32 %v1187, 1.442695
        %v1194 = vpow.pop %v1193
        %v1195 = vmul.f32 %v1188, 1.442695
        %v1196 = vpow.pop %v1195
        %v1197 = vadd.f32 %v1190, 1.0
        %v1198 = vadd.f32 %v1192, 1.0
        %v1199 = vadd.f32 %v1194, 1.0
        %v1200 = vadd.f32 %v1196, 1.0
        %v1201 = vrcp.pop %v1197
        %v1202 = vmul.f32 1.0, %v1201
        %v1203 = vrcp.pop %v1198
        %v1204 = vmul.f32 1.0, %v1203
        %v1205 = vrcp.pop %v1199
        %v1206 = vmul.f32 1.0, %v1205
        %v1207 = vrcp.pop %v1200
        %v1208 = vmul.f32 1.0, %v1207
        %v1209 = vtanh.pop %v1056
        %v1210 = vtanh.pop %v1058
        %v1211 = vtanh.pop %v1097
        %v1212 = vtanh.pop %v1099
        %v1213 = vxor.u32 %v1138, 2147483648
        %v1214 = vxor.u32 %v1140, 2147483648
        %v1215 = vxor.u32 %v1179, 2147483648
        %v1216 = vxor.u32 %v1181, 2147483648
        %v1217 = vmul.f32 %v1213, 1.442695
        %v1218 = vpow.pop %v1217
        %v1219 = vmul.f32 %v1214, 1.442695
        %v1220 = vpow.pop %v1219
        %v1221 = vmul.f32 %v1215, 1.442695
        %v1222 = vpow.pop %v1221
        %v1223 = vmul.f32 %v1216, 1.442695
        %v1224 = vpow.pop %v1223
        %v1225 = vadd.f32 %v1218, 1.0
        %v1226 = vadd.f32 %v1220, 1.0
        %v1227 = vadd.f32 %v1222, 1.0
        %v1228 = vadd.f32 %v1224, 1.0
        %v1229 = vrcp.pop %v1225
        %v1230 = vmul.f32 1.0, %v1229
        %v1231 = vrcp.pop %v1226
        %v1232 = vmul.f32 1.0, %v1231
        %v1233 = vrcp.pop %v1227
        %v1234 = vmul.f32 1.0, %v1233
        %v1235 = vrcp.pop %v1228
        %v1236 = vmul.f32 1.0, %v1235
        %v1237 = vmul.f32 %v1202, %v1209
        %v1238 = vmul.f32 %v1204, %v1210
        %v1239 = vmul.f32 %v1206, %v1211
        %v1240 = vmul.f32 %v1208, %v1212
        %v1241 = vtanh.pop %v1237
        %v1242 = vtanh.pop %v1238
        %v1243 = vtanh.pop %v1239
        %v1244 = vtanh.pop %v1240
        %v1245 = vmul.f32 %v1230, %v1241
        %v1246 = vmul.f32 %v1232, %v1242
        %v1247 = vmul.f32 %v1234, %v1243
        %v1248 = vmul.f32 %v1236, %v1244
        %v1249 = vpack.c.bf16 %v1245, %v1245
        %v1250 = vpack.c.bf16 %v1246, %v1246
        %v1251 = vpack.c.bf16 %v1247, %v1247
        %v1252 = vpack.c.bf16 %v1248, %v1248
        %v1253 = vld [vmem:[#allocation7] sm:$0xff]
        %v1254 = vld [vmem:[#allocation7 + $0x10] sm:$0xff]
        %v1255 = vld [vmem:[#allocation7 + $0x20] sm:$0xff]
        %v1256 = vld [vmem:[#allocation7 + $0x30] sm:$0xff]
        %v1257 = vld [vmem:[#allocation7 + $0x40] sm:$0xff]
        %v1258 = vld [vmem:[#allocation7 + $0x50] sm:$0xff]
        %v1259 = vld [vmem:[#allocation7 + $0x60] sm:$0xff]
        %v1260 = vld [vmem:[#allocation7 + $0x70] sm:$0xff]
        %v1261 = vld [vmem:[#allocation7 + $0x80] sm:$0xff]
        %v1262 = vld [vmem:[#allocation7 + $0x90] sm:$0xff]
        %v1263 = vld [vmem:[#allocation7 + $0xa0] sm:$0xff]
        %v1264 = vld [vmem:[#allocation7 + $0xb0] sm:$0xff]
        %v1265 = vld [vmem:[#allocation7 + $0xc0] sm:$0xff]
        %v1266 = vld [vmem:[#allocation7 + $0xd0] sm:$0xff]
        %v1267 = vld [vmem:[#allocation7 + $0xe0] sm:$0xff]
        %v1268 = vld [vmem:[#allocation7 + $0xf0] sm:$0xff]
        %v1269 = vld [vmem:[#allocation7 + $0x100] sm:$0xff]
        %v1270 = vld [vmem:[#allocation7 + $0x110] sm:$0xff]
        %v1271 = vld [vmem:[#allocation7 + $0x120] sm:$0xff]
        %v1272 = vld [vmem:[#allocation7 + $0x130] sm:$0xff]
        %v1273 = vld [vmem:[#allocation7 + $0x140] sm:$0xff]
        %v1274 = vld [vmem:[#allocation7 + $0x150] sm:$0xff]
        %v1275 = vld [vmem:[#allocation7 + $0x160] sm:$0xff]
        %v1276 = vld [vmem:[#allocation7 + $0x170] sm:$0xff]
        %v1277 = vld [vmem:[#allocation7 + $0x180] sm:$0xff]
        %v1278 = vld [vmem:[#allocation7 + $0x190] sm:$0xff]
        %v1279 = vld [vmem:[#allocation7 + $0x1a0] sm:$0xff]
        %v1280 = vld [vmem:[#allocation7 + $0x1b0] sm:$0xff]
        %v1281 = vld [vmem:[#allocation7 + $0x1c0] sm:$0xff]
        %v1282 = vld [vmem:[#allocation7 + $0x1d0] sm:$0xff]
        %v1283 = vld [vmem:[#allocation7 + $0x1e0] sm:$0xff]
        %v1284 = vld [vmem:[#allocation7 + $0x1f0] sm:$0xff]
        %v1285 = vld [vmem:[#allocation7 + $0x200] sm:$0xff]
        %v1286 = vld [vmem:[#allocation7 + $0x210] sm:$0xff]
        %v1287 = vld [vmem:[#allocation7 + $0x220] sm:$0xff]
        %v1288 = vld [vmem:[#allocation7 + $0x230] sm:$0xff]
        %v1289 = vld [vmem:[#allocation7 + $0x240] sm:$0xff]
        %v1290 = vld [vmem:[#allocation7 + $0x250] sm:$0xff]
        %v1291 = vld [vmem:[#allocation7 + $0x260] sm:$0xff]
        %v1292 = vld [vmem:[#allocation7 + $0x270] sm:$0xff]
        %v1293 = vld [vmem:[#allocation7 + $0x280] sm:$0xff]
        %v1294 = vld [vmem:[#allocation7 + $0x290] sm:$0xff]
        %v1295 = vld [vmem:[#allocation7 + $0x2a0] sm:$0xff]
        %v1296 = vld [vmem:[#allocation7 + $0x2b0] sm:$0xff]
        %v1297 = vld [vmem:[#allocation7 + $0x2c0] sm:$0xff]
        %v1298 = vld [vmem:[#allocation7 + $0x2d0] sm:$0xff]
        %v1299 = vld [vmem:[#allocation7 + $0x2e0] sm:$0xff]
        %v1300 = vld [vmem:[#allocation7 + $0x2f0] sm:$0xff]
        %v1301 = vld [vmem:[#allocation7 + $0x300] sm:$0xff]
        %v1302 = vld [vmem:[#allocation7 + $0x310] sm:$0xff]
        %v1303 = vld [vmem:[#allocation7 + $0x320] sm:$0xff]
        %v1304 = vld [vmem:[#allocation7 + $0x330] sm:$0xff]
        %v1305 = vld [vmem:[#allocation7 + $0x340] sm:$0xff]
        %v1306 = vld [vmem:[#allocation7 + $0x350] sm:$0xff]
        %v1307 = vld [vmem:[#allocation7 + $0x360] sm:$0xff]
        %v1308 = vld [vmem:[#allocation7 + $0x370] sm:$0xff]
        %v1309 = vld [vmem:[#allocation7 + $0x380] sm:$0xff]
        %v1310 = vld [vmem:[#allocation7 + $0x390] sm:$0xff]
        %v1311 = vld [vmem:[#allocation7 + $0x3a0] sm:$0xff]
        %v1312 = vld [vmem:[#allocation7 + $0x3b0] sm:$0xff]
        %v1313 = vld [vmem:[#allocation7 + $0x3c0] sm:$0xff]
        %v1314 = vld [vmem:[#allocation7 + $0x3d0] sm:$0xff]
        %v1315 = vld [vmem:[#allocation7 + $0x3e0] sm:$0xff]
        %v1316 = vld [vmem:[#allocation7 + $0x3f0] sm:$0xff]
        %v1317 = vld [vmem:[#allocation10 + $0xc] sm:$0x3]
        %v1319 = vlaneseq
        %v1320 = vshrl.u32 %v1319, 7
        %v1321 = vsub.s32 0, %v1320
        %v1322 = vrot.slane %v1317, %v1321
        %v1323 = vlaneseq
        %v1324 = vshrl.u32 %v1323, 7
        %v1325 = vsub.s32 1, %v1324
        %v1326 = vrot.slane %v1317, %v1325
        %v1393 = vunpack.c.l.b16 %v1253
        %v1394 = vunpack.c.h.b16 %v1253
        %v1395 = vunpack.c.l.b16 %v1254
        %v1396 = vunpack.c.h.b16 %v1254
        %v1397 = vunpack.c.l.b16 %v1255
        %v1398 = vunpack.c.h.b16 %v1255
        %v1399 = vunpack.c.l.b16 %v1256
        %v1400 = vunpack.c.h.b16 %v1256
        %v1401 = vunpack.c.l.b16 %v1257
        %v1402 = vunpack.c.h.b16 %v1257
        %v1403 = vunpack.c.l.b16 %v1258
        %v1404 = vunpack.c.h.b16 %v1258
        %v1405 = vunpack.c.l.b16 %v1259
        %v1406 = vunpack.c.h.b16 %v1259
        %v1407 = vunpack.c.l.b16 %v1260
        %v1408 = vunpack.c.h.b16 %v1260
        %v1409 = vunpack.c.l.b16 %v1261
        %v1410 = vunpack.c.h.b16 %v1261
        %v1411 = vunpack.c.l.b16 %v1262
        %v1412 = vunpack.c.h.b16 %v1262
        %v1413 = vunpack.c.l.b16 %v1263
        %v1414 = vunpack.c.h.b16 %v1263
        %v1415 = vunpack.c.l.b16 %v1264
        %v1416 = vunpack.c.h.b16 %v1264
        %v1417 = vunpack.c.l.b16 %v1265
        %v1418 = vunpack.c.h.b16 %v1265
        %v1419 = vunpack.c.l.b16 %v1266
        %v1420 = vunpack.c.h.b16 %v1266
        %v1421 = vunpack.c.l.b16 %v1267
        %v1422 = vunpack.c.h.b16 %v1267
        %v1423 = vunpack.c.l.b16 %v1268
        %v1424 = vunpack.c.h.b16 %v1268
        %v1425 = vunpack.c.l.b16 %v1269
        %v1426 = vunpack.c.h.b16 %v1269
        %v1427 = vunpack.c.l.b16 %v1270
        %v1428 = vunpack.c.h.b16 %v1270
        %v1429 = vunpack.c.l.b16 %v1271
        %v1430 = vunpack.c.h.b16 %v1271
        %v1431 = vunpack.c.l.b16 %v1272
        %v1432 = vunpack.c.h.b16 %v1272
        %v1433 = vunpack.c.l.b16 %v1273
        %v1434 = vunpack.c.h.b16 %v1273
        %v1435 = vunpack.c.l.b16 %v1274
        %v1436 = vunpack.c.h.b16 %v1274
        %v1437 = vunpack.c.l.b16 %v1275
        %v1438 = vunpack.c.h.b16 %v1275
        %v1439 = vunpack.c.l.b16 %v1276
        %v1440 = vunpack.c.h.b16 %v1276
        %v1441 = vunpack.c.l.b16 %v1277
        %v1442 = vunpack.c.h.b16 %v1277
        %v1443 = vunpack.c.l.b16 %v1278
        %v1444 = vunpack.c.h.b16 %v1278
        %v1445 = vunpack.c.l.b16 %v1279
        %v1446 = vunpack.c.h.b16 %v1279
        %v1447 = vunpack.c.l.b16 %v1280
        %v1448 = vunpack.c.h.b16 %v1280
        %v1449 = vunpack.c.l.b16 %v1281
        %v1450 = vunpack.c.h.b16 %v1281
        %v1451 = vunpack.c.l.b16 %v1282
        %v1452 = vunpack.c.h.b16 %v1282
        %v1453 = vunpack.c.l.b16 %v1283
        %v1454 = vunpack.c.h.b16 %v1283
        %v1455 = vunpack.c.l.b16 %v1284
        %v1456 = vunpack.c.h.b16 %v1284
        %v1457 = vunpack.c.l.b16 %v1285
        %v1458 = vunpack.c.h.b16 %v1285
        %v1459 = vunpack.c.l.b16 %v1286
        %v1460 = vunpack.c.h.b16 %v1286
        %v1461 = vunpack.c.l.b16 %v1287
        %v1462 = vunpack.c.h.b16 %v1287
        %v1463 = vunpack.c.l.b16 %v1288
        %v1464 = vunpack.c.h.b16 %v1288
        %v1465 = vunpack.c.l.b16 %v1289
        %v1466 = vunpack.c.h.b16 %v1289
        %v1467 = vunpack.c.l.b16 %v1290
        %v1468 = vunpack.c.h.b16 %v1290
        %v1469 = vunpack.c.l.b16 %v1291
        %v1470 = vunpack.c.h.b16 %v1291
        %v1471 = vunpack.c.l.b16 %v1292
        %v1472 = vunpack.c.h.b16 %v1292
        %v1473 = vunpack.c.l.b16 %v1293
        %v1474 = vunpack.c.h.b16 %v1293
        %v1475 = vunpack.c.l.b16 %v1294
        %v1476 = vunpack.c.h.b16 %v1294
        %v1477 = vunpack.c.l.b16 %v1295
        %v1478 = vunpack.c.h.b16 %v1295
        %v1479 = vunpack.c.l.b16 %v1296
        %v1480 = vunpack.c.h.b16 %v1296
        %v1481 = vunpack.c.l.b16 %v1297
        %v1482 = vunpack.c.h.b16 %v1297
        %v1483 = vunpack.c.l.b16 %v1298
        %v1484 = vunpack.c.h.b16 %v1298
        %v1485 = vunpack.c.l.b16 %v1299
        %v1486 = vunpack.c.h.b16 %v1299
        %v1487 = vunpack.c.l.b16 %v1300
        %v1488 = vunpack.c.h.b16 %v1300
        %v1489 = vunpack.c.l.b16 %v1301
        %v1490 = vunpack.c.h.b16 %v1301
        %v1491 = vunpack.c.l.b16 %v1302
        %v1492 = vunpack.c.h.b16 %v1302
        %v1493 = vunpack.c.l.b16 %v1303
        %v1494 = vunpack.c.h.b16 %v1303
        %v1495 = vunpack.c.l.b16 %v1304
        %v1496 = vunpack.c.h.b16 %v1304
        %v1497 = vunpack.c.l.b16 %v1305
        %v1498 = vunpack.c.h.b16 %v1305
        %v1499 = vunpack.c.l.b16 %v1306
        %v1500 = vunpack.c.h.b16 %v1306
        %v1501 = vunpack.c.l.b16 %v1307
        %v1502 = vunpack.c.h.b16 %v1307
        %v1503 = vunpack.c.l.b16 %v1308
        %v1504 = vunpack.c.h.b16 %v1308
        %v1505 = vunpack.c.l.b16 %v1309
        %v1506 = vunpack.c.h.b16 %v1309
        %v1507 = vunpack.c.l.b16 %v1310
        %v1508 = vunpack.c.h.b16 %v1310
        %v1509 = vunpack.c.l.b16 %v1311
        %v1510 = vunpack.c.h.b16 %v1311
        %v1511 = vunpack.c.l.b16 %v1312
        %v1512 = vunpack.c.h.b16 %v1312
        %v1513 = vunpack.c.l.b16 %v1313
        %v1514 = vunpack.c.h.b16 %v1313
        %v1515 = vunpack.c.l.b16 %v1314
        %v1516 = vunpack.c.h.b16 %v1314
        %v1517 = vunpack.c.l.b16 %v1315
        %v1518 = vunpack.c.h.b16 %v1315
        %v1519 = vunpack.c.l.b16 %v1316
        %v1520 = vunpack.c.h.b16 %v1316
        %v1521 = vpack.c.b16 %v1395, %v1393
        %v1522 = vpack.c.b16 %v1396, %v1394
        %v1523 = vpack.c.b16 %v1399, %v1397
        %v1524 = vpack.c.b16 %v1400, %v1398
        %v1525 = vpack.c.b16 %v1403, %v1401
        %v1526 = vpack.c.b16 %v1404, %v1402
        %v1527 = vpack.c.b16 %v1407, %v1405
        %v1528 = vpack.c.b16 %v1408, %v1406
        %v1529 = vpack.c.b16 %v1411, %v1409
        %v1530 = vpack.c.b16 %v1412, %v1410
        %v1531 = vpack.c.b16 %v1415, %v1413
        %v1532 = vpack.c.b16 %v1416, %v1414
        %v1533 = vpack.c.b16 %v1419, %v1417
        %v1534 = vpack.c.b16 %v1420, %v1418
        %v1535 = vpack.c.b16 %v1423, %v1421
        %v1536 = vpack.c.b16 %v1424, %v1422
        %v1537 = vpack.c.b16 %v1427, %v1425
        %v1538 = vpack.c.b16 %v1428, %v1426
        %v1539 = vpack.c.b16 %v1431, %v1429
        %v1540 = vpack.c.b16 %v1432, %v1430
        %v1541 = vpack.c.b16 %v1435, %v1433
        %v1542 = vpack.c.b16 %v1436, %v1434
        %v1543 = vpack.c.b16 %v1439, %v1437
        %v1544 = vpack.c.b16 %v1440, %v1438
        %v1545 = vpack.c.b16 %v1443, %v1441
        %v1546 = vpack.c.b16 %v1444, %v1442
        %v1547 = vpack.c.b16 %v1447, %v1445
        %v1548 = vpack.c.b16 %v1448, %v1446
        %v1549 = vpack.c.b16 %v1451, %v1449
        %v1550 = vpack.c.b16 %v1452, %v1450
        %v1551 = vpack.c.b16 %v1455, %v1453
        %v1552 = vpack.c.b16 %v1456, %v1454
        %v1553 = vpack.c.b16 %v1459, %v1457
        %v1554 = vpack.c.b16 %v1460, %v1458
        %v1555 = vpack.c.b16 %v1463, %v1461
        %v1556 = vpack.c.b16 %v1464, %v1462
        %v1557 = vpack.c.b16 %v1467, %v1465
        %v1558 = vpack.c.b16 %v1468, %v1466
        %v1559 = vpack.c.b16 %v1471, %v1469
        %v1560 = vpack.c.b16 %v1472, %v1470
        %v1561 = vpack.c.b16 %v1475, %v1473
        %v1562 = vpack.c.b16 %v1476, %v1474
        %v1563 = vpack.c.b16 %v1479, %v1477
        %v1564 = vpack.c.b16 %v1480, %v1478
        %v1565 = vpack.c.b16 %v1483, %v1481
        %v1566 = vpack.c.b16 %v1484, %v1482
        %v1567 = vpack.c.b16 %v1487, %v1485
        %v1568 = vpack.c.b16 %v1488, %v1486
        %v1569 = vpack.c.b16 %v1491, %v1489
        %v1570 = vpack.c.b16 %v1492, %v1490
        %v1571 = vpack.c.b16 %v1495, %v1493
        %v1572 = vpack.c.b16 %v1496, %v1494
        %v1573 = vpack.c.b16 %v1499, %v1497
        %v1574 = vpack.c.b16 %v1500, %v1498
        %v1575 = vpack.c.b16 %v1503, %v1501
        %v1576 = vpack.c.b16 %v1504, %v1502
        %v1577 = vpack.c.b16 %v1507, %v1505
        %v1578 = vpack.c.b16 %v1508, %v1506
        %v1579 = vpack.c.b16 %v1511, %v1509
        %v1580 = vpack.c.b16 %v1512, %v1510
        %v1581 = vpack.c.b16 %v1515, %v1513
        %v1582 = vpack.c.b16 %v1516, %v1514
        %v1583 = vpack.c.b16 %v1519, %v1517
        %v1584 = vpack.c.b16 %v1520, %v1518
        %1649 = vmatprep.subr.bf16.mxu0 %v1536
        %1650 = vmatpush1.bf16.msra.mxu0 %v1535
        %1651 = vmatprep.subr.bf16.mxu0 %v1534
        %1652 = vmatpush1.bf16.msra.mxu0 %v1533
        %1653 = vmatprep.subr.bf16.mxu0 %v1532
        %1654 = vmatpush1.bf16.msra.mxu0 %v1531
        %1655 = vmatprep.subr.bf16.mxu0 %v1530
        %1656 = vmatpush1.bf16.msra.mxu0 %v1529
        %1657 = vmatprep.subr.bf16.mxu0 %v1528
        %1658 = vmatpush1.bf16.msra.mxu0 %v1527
        %1659 = vmatprep.subr.bf16.mxu0 %v1526
        %1660 = vmatpush1.bf16.msra.mxu0 %v1525
        %1661 = vmatprep.subr.bf16.mxu0 %v1524
        %1662 = vmatpush1.bf16.msra.mxu0 %v1523
        %1663 = vmatprep.subr.bf16.mxu0 %v1522
        %1664 = vmatpush1.bf16.msra.mxu0 %v1521
        %1665 = vmatprep.subr.bf16.mxu0 %v1552
        %1666 = vmatpush2.bf16.msra.mxu0 %v1551
        %1667 = vmatprep.subr.bf16.mxu0 %v1550
        %1668 = vmatpush2.bf16.msra.mxu0 %v1549
        %1669 = vmatprep.subr.bf16.mxu0 %v1548
        %1670 = vmatpush2.bf16.msra.mxu0 %v1547
        %1671 = vmatprep.subr.bf16.mxu0 %v1546
        %1672 = vmatpush2.bf16.msra.mxu0 %v1545
        %1673 = vmatprep.subr.bf16.mxu0 %v1544
        %1674 = vmatpush2.bf16.msra.mxu0 %v1543
        %1675 = vmatprep.subr.bf16.mxu0 %v1542
        %1676 = vmatpush2.bf16.msra.mxu0 %v1541
        %1677 = vmatprep.subr.bf16.mxu0 %v1540
        %1678 = vmatpush2.bf16.msra.mxu0 %v1539
        %1679 = vmatprep.subr.bf16.mxu0 %v1538
        %1680 = vmatpush2.bf16.msra.mxu0 %v1537
        %1681 = vmatprep.mubr.bf16.mxu0 %v1250
        %1682 = vmatmul.mubr.bf16.gmra.mxu0 %v1249
        %v1683 = vpop.f32.mrf.mxu0
        %v1684 = vadd.f32 %v1322, %v1683
        %v1685 = vpop.f32.mrf.mxu0
        %v1686 = vadd.f32 %v1326, %v1685
        %v1687 = vpop.f32.mrf.mxu0
        %v1688 = vpop.f32.mrf.mxu0
        %1689 = vdwg.mxu0
        %1690 = vmatprep.subr.bf16.mxu0 %v1568
        %1691 = vmatpush1.bf16.msra.mxu0 %v1567
        %1692 = vmatprep.subr.bf16.mxu0 %v1566
        %1693 = vmatpush1.bf16.msra.mxu0 %v1565
        %1694 = vmatprep.subr.bf16.mxu0 %v1564
        %1695 = vmatpush1.bf16.msra.mxu0 %v1563
        %1696 = vmatprep.subr.bf16.mxu0 %v1562
        %1697 = vmatpush1.bf16.msra.mxu0 %v1561
        %1698 = vmatprep.subr.bf16.mxu0 %v1560
        %1699 = vmatpush1.bf16.msra.mxu0 %v1559
        %1700 = vmatprep.subr.bf16.mxu0 %v1558
        %1701 = vmatpush1.bf16.msra.mxu0 %v1557
        %1702 = vmatprep.subr.bf16.mxu0 %v1556
        %1703 = vmatpush1.bf16.msra.mxu0 %v1555
        %1704 = vmatprep.subr.bf16.mxu0 %v1554
        %1705 = vmatpush1.bf16.msra.mxu0 %v1553
        %1706 = vmatprep.subr.bf16.mxu0 %v1584
        %1707 = vmatpush2.bf16.msra.mxu0 %v1583
        %1708 = vmatprep.subr.bf16.mxu0 %v1582
        %1709 = vmatpush2.bf16.msra.mxu0 %v1581
        %1710 = vmatprep.subr.bf16.mxu0 %v1580
        %1711 = vmatpush2.bf16.msra.mxu0 %v1579
        %1712 = vmatprep.subr.bf16.mxu0 %v1578
        %1713 = vmatpush2.bf16.msra.mxu0 %v1577
        %1714 = vmatprep.subr.bf16.mxu0 %v1576
        %1715 = vmatpush2.bf16.msra.mxu0 %v1575
        %1716 = vmatprep.subr.bf16.mxu0 %v1574
        %1717 = vmatpush2.bf16.msra.mxu0 %v1573
        %1718 = vmatprep.subr.bf16.mxu0 %v1572
        %1719 = vmatpush2.bf16.msra.mxu0 %v1571
        %1720 = vmatprep.subr.bf16.mxu0 %v1570
        %1721 = vmatpush2.bf16.msra.mxu0 %v1569
        %1722 = vmatprep.mubr.bf16.mxu0 %v1252
        %1723 = vmatmul.mubr.bf16.gmra.mxu0 %v1251
        %v1724 = vpop.f32.mrf.mxu0
        %v1725 = vadd.f32 %v1684, %v1724
        %v1726 = vpop.f32.mrf.mxu0
        %v1727 = vadd.f32 %v1686, %v1726
        %v1728 = vpop.f32.mrf.mxu0
        %v1729 = vpop.f32.mrf.mxu0
        %1730 = vdwg.mxu0
        %vm1731 = vcmp.ge.f32.partialorder %v1725, 0.0
        %vm1732 = vcmp.ge.f32.partialorder %v1727, 0.0
        %v1733 = vmul.f32 %v1725, 0.01
        %v1734 = vmul.f32 %v1727, 0.01
        %v1735 = vsel %vm1731, %v1725, %v1733
        %v1736 = vsel %vm1732, %v1727, %v1734
        %v1737 = vld [vmem:[#allocation10 + $0xe] sm:$0x3]
        %v1738 = vld [vmem:[#allocation10 + $0x10] sm:$0x3]
        %v1739 = vadd.f32 %v1735, %v1736
        %1740 = vadd.xlane.f32.xlu0 %v1739
        %v1741 = vpop.xlane.xlu0 %1740
        %v1742 = vrcp.pop 256.0
        %v1743 = vmul.f32 %v1741, %v1742
        %v1744 = vsub.f32 %v1735, %v1743
        %v1745 = vsub.f32 %v1736, %v1743
        %v1746 = vmul.f32 %v1744, %v1744
        %v1747 = vmul.f32 %v1745, %v1745
        %v1748 = vadd.f32 %v1746, %v1747
        %1749 = vadd.xlane.f32.xlu0 %v1748
        %v1750 = vpop.xlane.xlu0 %1749
        %v1751 = vmul.f32 %v1750, %v1742
        %v1752 = vadd.f32 %v1751, 1e-05
        %v1753 = vrsqrt.pop %v1752
        %v1754 = vmul.f32 %v1744, %v1753
        %v1755 = vmul.f32 %v1745, %v1753
        %v1757 = vlaneseq
        %v1758 = vshrl.u32 %v1757, 7
        %v1759 = vsub.s32 0, %v1758
        %v1760 = vrot.slane %v1737, %v1759
        %v1761 = vlaneseq
        %v1762 = vshrl.u32 %v1761, 7
        %v1763 = vsub.s32 1, %v1762
        %v1764 = vrot.slane %v1737, %v1763
        %v1767 = vmul.f32 %v1754, %v1760
        %v1768 = vmul.f32 %v1755, %v1764
        %v1770 = vlaneseq
        %v1771 = vshrl.u32 %v1770, 7
        %v1772 = vsub.s32 0, %v1771
        %v1773 = vrot.slane %v1738, %v1772
        %v1774 = vlaneseq
        %v1775 = vshrl.u32 %v1774, 7
        %v1776 = vsub.s32 1, %v1775
        %v1777 = vrot.slane %v1738, %v1776
        %v1780 = vadd.f32 %v1767, %v1773
        %v1781 = vadd.f32 %v1768, %v1777
        %v1782 = vpack.c.bf16 %v1780, %v1780
        %v1783 = vpack.c.bf16 %v1781, %v1781
        %v1784 = vld [vmem:[#allocation8] sm:$0xff]
        %v1785 = vld [vmem:[#allocation8 + $0x8] sm:$0xff]
        %v1786 = vld [vmem:[#allocation8 + $0x14] sm:$0xff]
        %v1787 = vld [vmem:[#allocation8 + $0x1c] sm:$0xff]
        %v1788 = vld [vmem:[#allocation8 + $0x28] sm:$0xff]
        %v1789 = vld [vmem:[#allocation8 + $0x30] sm:$0xff]
        %v1790 = vld [vmem:[#allocation8 + $0x3c] sm:$0xff]
        %v1791 = vld [vmem:[#allocation8 + $0x44] sm:$0xff]
        %v1792 = vld [vmem:[#allocation8 + $0x50] sm:$0xff]
        %v1793 = vld [vmem:[#allocation8 + $0x58] sm:$0xff]
        %v1794 = vld [vmem:[#allocation8 + $0x64] sm:$0xff]
        %v1795 = vld [vmem:[#allocation8 + $0x6c] sm:$0xff]
        %v1796 = vld [vmem:[#allocation8 + $0x78] sm:$0xff]
        %v1797 = vld [vmem:[#allocation8 + $0x80] sm:$0xff]
        %v1798 = vld [vmem:[#allocation8 + $0x8c] sm:$0xff]
        %v1799 = vld [vmem:[#allocation8 + $0x94] sm:$0xff]
        %v1800 = vld [vmem:[#allocation8 + $0xa0] sm:$0xff]
        %v1801 = vld [vmem:[#allocation8 + $0xa8] sm:$0xff]
        %v1802 = vld [vmem:[#allocation8 + $0xb4] sm:$0xff]
        %v1803 = vld [vmem:[#allocation8 + $0xbc] sm:$0xff]
        %v1804 = vld [vmem:[#allocation8 + $0xc8] sm:$0xff]
        %v1805 = vld [vmem:[#allocation8 + $0xd0] sm:$0xff]
        %v1806 = vld [vmem:[#allocation8 + $0xdc] sm:$0xff]
        %v1807 = vld [vmem:[#allocation8 + $0xe4] sm:$0xff]
        %v1808 = vld [vmem:[#allocation8 + $0xf0] sm:$0xff]
        %v1809 = vld [vmem:[#allocation8 + $0xf8] sm:$0xff]
        %v1810 = vld [vmem:[#allocation8 + $0x104] sm:$0xff]
        %v1811 = vld [vmem:[#allocation8 + $0x10c] sm:$0xff]
        %v1812 = vld [vmem:[#allocation8 + $0x118] sm:$0xff]
        %v1813 = vld [vmem:[#allocation8 + $0x120] sm:$0xff]
        %v1814 = vld [vmem:[#allocation8 + $0x12c] sm:$0xff]
        %v1815 = vld [vmem:[#allocation8 + $0x134] sm:$0xff]
        %v1816 = vld [vmem:[#allocation8 + $0x140] sm:$0xff]
        %v1817 = vld [vmem:[#allocation8 + $0x148] sm:$0xff]
        %v1818 = vld [vmem:[#allocation8 + $0x154] sm:$0xff]
        %v1819 = vld [vmem:[#allocation8 + $0x15c] sm:$0xff]
        %v1820 = vld [vmem:[#allocation8 + $0x168] sm:$0xff]
        %v1821 = vld [vmem:[#allocation8 + $0x170] sm:$0xff]
        %v1822 = vld [vmem:[#allocation8 + $0x17c] sm:$0xff]
        %v1823 = vld [vmem:[#allocation8 + $0x184] sm:$0xff]
        %v1824 = vld [vmem:[#allocation8 + $0x190] sm:$0xff]
        %v1825 = vld [vmem:[#allocation8 + $0x198] sm:$0xff]
        %v1826 = vld [vmem:[#allocation8 + $0x1a4] sm:$0xff]
        %v1827 = vld [vmem:[#allocation8 + $0x1ac] sm:$0xff]
        %v1828 = vld [vmem:[#allocation8 + $0x1b8] sm:$0xff]
        %v1829 = vld [vmem:[#allocation8 + $0x1c0] sm:$0xff]
        %v1830 = vld [vmem:[#allocation8 + $0x1cc] sm:$0xff]
        %v1831 = vld [vmem:[#allocation8 + $0x1d4] sm:$0xff]
        %v1832 = vld [vmem:[#allocation8 + $0x1e0] sm:$0xff]
        %v1833 = vld [vmem:[#allocation8 + $0x1e8] sm:$0xff]
        %v1834 = vld [vmem:[#allocation8 + $0x1f4] sm:$0xff]
        %v1835 = vld [vmem:[#allocation8 + $0x1fc] sm:$0xff]
        %v1836 = vld [vmem:[#allocation8 + $0x208] sm:$0xff]
        %v1837 = vld [vmem:[#allocation8 + $0x210] sm:$0xff]
        %v1838 = vld [vmem:[#allocation8 + $0x21c] sm:$0xff]
        %v1839 = vld [vmem:[#allocation8 + $0x224] sm:$0xff]
        %v1840 = vld [vmem:[#allocation8 + $0x230] sm:$0xff]
        %v1841 = vld [vmem:[#allocation8 + $0x238] sm:$0xff]
        %v1842 = vld [vmem:[#allocation8 + $0x244] sm:$0xff]
        %v1843 = vld [vmem:[#allocation8 + $0x24c] sm:$0xff]
        %v1844 = vld [vmem:[#allocation8 + $0x258] sm:$0xff]
        %v1845 = vld [vmem:[#allocation8 + $0x260] sm:$0xff]
        %v1846 = vld [vmem:[#allocation8 + $0x26c] sm:$0xff]
        %v1847 = vld [vmem:[#allocation8 + $0x274] sm:$0xff]
        %v1848 = vld [vmem:[#allocation10 + $0x12] sm:$0xf]
        %v1850 = vlaneseq
        %v1851 = vshrl.u32 %v1850, 7
        %v1852 = vsub.s32 0, %v1851
        %v1853 = vrot.slane %v1848, %v1852
        %v1854 = vlaneseq
        %v1855 = vshrl.u32 %v1854, 7
        %v1856 = vsub.s32 1, %v1855
        %v1857 = vrot.slane %v1848, %v1856
        %v1858 = vlaneseq
        %v1859 = vshrl.u32 %v1858, 7
        %v1860 = vsub.s32 2, %v1859
        %v1861 = vrot.slane %v1848, %v1860
        %v1862 = vlaneseq
        %v1863 = vshrl.u32 %v1862, 7
        %v1864 = vsub.s32 3, %v1863
        %v1865 = vrot.slane %v1848, %v1864
        %v1934 = vunpack.c.l.b16 %v1784
        %v1935 = vunpack.c.h.b16 %v1784
        %v1936 = vunpack.c.l.b16 %v1785
        %v1937 = vunpack.c.h.b16 %v1785
        %v1938 = vunpack.c.l.b16 %v1786
        %v1939 = vunpack.c.h.b16 %v1786
        %v1940 = vunpack.c.l.b16 %v1787
        %v1941 = vunpack.c.h.b16 %v1787
        %v1942 = vunpack.c.l.b16 %v1788
        %v1943 = vunpack.c.h.b16 %v1788
        %v1944 = vunpack.c.l.b16 %v1789
        %v1945 = vunpack.c.h.b16 %v1789
        %v1946 = vunpack.c.l.b16 %v1790
        %v1947 = vunpack.c.h.b16 %v1790
        %v1948 = vunpack.c.l.b16 %v1791
        %v1949 = vunpack.c.h.b16 %v1791
        %v1950 = vunpack.c.l.b16 %v1792
        %v1951 = vunpack.c.h.b16 %v1792
        %v1952 = vunpack.c.l.b16 %v1793
        %v1953 = vunpack.c.h.b16 %v1793
        %v1954 = vunpack.c.l.b16 %v1794
        %v1955 = vunpack.c.h.b16 %v1794
        %v1956 = vunpack.c.l.b16 %v1795
        %v1957 = vunpack.c.h.b16 %v1795
        %v1958 = vunpack.c.l.b16 %v1796
        %v1959 = vunpack.c.h.b16 %v1796
        %v1960 = vunpack.c.l.b16 %v1797
        %v1961 = vunpack.c.h.b16 %v1797
        %v1962 = vunpack.c.l.b16 %v1798
        %v1963 = vunpack.c.h.b16 %v1798
        %v1964 = vunpack.c.l.b16 %v1799
        %v1965 = vunpack.c.h.b16 %v1799
        %v1966 = vunpack.c.l.b16 %v1800
        %v1967 = vunpack.c.h.b16 %v1800
        %v1968 = vunpack.c.l.b16 %v1801
        %v1969 = vunpack.c.h.b16 %v1801
        %v1970 = vunpack.c.l.b16 %v1802
        %v1971 = vunpack.c.h.b16 %v1802
        %v1972 = vunpack.c.l.b16 %v1803
        %v1973 = vunpack.c.h.b16 %v1803
        %v1974 = vunpack.c.l.b16 %v1804
        %v1975 = vunpack.c.h.b16 %v1804
        %v1976 = vunpack.c.l.b16 %v1805
        %v1977 = vunpack.c.h.b16 %v1805
        %v1978 = vunpack.c.l.b16 %v1806
        %v1979 = vunpack.c.h.b16 %v1806
        %v1980 = vunpack.c.l.b16 %v1807
        %v1981 = vunpack.c.h.b16 %v1807
        %v1982 = vunpack.c.l.b16 %v1808
        %v1983 = vunpack.c.h.b16 %v1808
        %v1984 = vunpack.c.l.b16 %v1809
        %v1985 = vunpack.c.h.b16 %v1809
        %v1986 = vunpack.c.l.b16 %v1810
        %v1987 = vunpack.c.h.b16 %v1810
        %v1988 = vunpack.c.l.b16 %v1811
        %v1989 = vunpack.c.h.b16 %v1811
        %v1990 = vunpack.c.l.b16 %v1812
        %v1991 = vunpack.c.h.b16 %v1812
        %v1992 = vunpack.c.l.b16 %v1813
        %v1993 = vunpack.c.h.b16 %v1813
        %v1994 = vunpack.c.l.b16 %v1814
        %v1995 = vunpack.c.h.b16 %v1814
        %v1996 = vunpack.c.l.b16 %v1815
        %v1997 = vunpack.c.h.b16 %v1815
        %v1998 = vunpack.c.l.b16 %v1816
        %v1999 = vunpack.c.h.b16 %v1816
        %v2000 = vunpack.c.l.b16 %v1817
        %v2001 = vunpack.c.h.b16 %v1817
        %v2002 = vunpack.c.l.b16 %v1818
        %v2003 = vunpack.c.h.b16 %v1818
        %v2004 = vunpack.c.l.b16 %v1819
        %v2005 = vunpack.c.h.b16 %v1819
        %v2006 = vunpack.c.l.b16 %v1820
        %v2007 = vunpack.c.h.b16 %v1820
        %v2008 = vunpack.c.l.b16 %v1821
        %v2009 = vunpack.c.h.b16 %v1821
        %v2010 = vunpack.c.l.b16 %v1822
        %v2011 = vunpack.c.h.b16 %v1822
        %v2012 = vunpack.c.l.b16 %v1823
        %v2013 = vunpack.c.h.b16 %v1823
        %v2014 = vunpack.c.l.b16 %v1824
        %v2015 = vunpack.c.h.b16 %v1824
        %v2016 = vunpack.c.l.b16 %v1825
        %v2017 = vunpack.c.h.b16 %v1825
        %v2018 = vunpack.c.l.b16 %v1826
        %v2019 = vunpack.c.h.b16 %v1826
        %v2020 = vunpack.c.l.b16 %v1827
        %v2021 = vunpack.c.h.b16 %v1827
        %v2022 = vunpack.c.l.b16 %v1828
        %v2023 = vunpack.c.h.b16 %v1828
        %v2024 = vunpack.c.l.b16 %v1829
        %v2025 = vunpack.c.h.b16 %v1829
        %v2026 = vunpack.c.l.b16 %v1830
        %v2027 = vunpack.c.h.b16 %v1830
        %v2028 = vunpack.c.l.b16 %v1831
        %v2029 = vunpack.c.h.b16 %v1831
        %v2030 = vunpack.c.l.b16 %v1832
        %v2031 = vunpack.c.h.b16 %v1832
        %v2032 = vunpack.c.l.b16 %v1833
        %v2033 = vunpack.c.h.b16 %v1833
        %v2034 = vunpack.c.l.b16 %v1834
        %v2035 = vunpack.c.h.b16 %v1834
        %v2036 = vunpack.c.l.b16 %v1835
        %v2037 = vunpack.c.h.b16 %v1835
        %v2038 = vunpack.c.l.b16 %v1836
        %v2039 = vunpack.c.h.b16 %v1836
        %v2040 = vunpack.c.l.b16 %v1837
        %v2041 = vunpack.c.h.b16 %v1837
        %v2042 = vunpack.c.l.b16 %v1838
        %v2043 = vunpack.c.h.b16 %v1838
        %v2044 = vunpack.c.l.b16 %v1839
        %v2045 = vunpack.c.h.b16 %v1839
        %v2046 = vunpack.c.l.b16 %v1840
        %v2047 = vunpack.c.h.b16 %v1840
        %v2048 = vunpack.c.l.b16 %v1841
        %v2049 = vunpack.c.h.b16 %v1841
        %v2050 = vunpack.c.l.b16 %v1842
        %v2051 = vunpack.c.h.b16 %v1842
        %v2052 = vunpack.c.l.b16 %v1843
        %v2053 = vunpack.c.h.b16 %v1843
        %v2054 = vunpack.c.l.b16 %v1844
        %v2055 = vunpack.c.h.b16 %v1844
        %v2056 = vunpack.c.l.b16 %v1845
        %v2057 = vunpack.c.h.b16 %v1845
        %v2058 = vunpack.c.l.b16 %v1846
        %v2059 = vunpack.c.h.b16 %v1846
        %v2060 = vunpack.c.l.b16 %v1847
        %v2061 = vunpack.c.h.b16 %v1847
        %v2062 = vpack.c.b16 %v1938, %v1934
        %v2063 = vpack.c.b16 %v1939, %v1935
        %v2064 = vpack.c.b16 %v1940, %v1936
        %v2065 = vpack.c.b16 %v1941, %v1937
        %v2066 = vpack.c.b16 %v1946, %v1942
        %v2067 = vpack.c.b16 %v1947, %v1943
        %v2068 = vpack.c.b16 %v1948, %v1944
        %v2069 = vpack.c.b16 %v1949, %v1945
        %v2070 = vpack.c.b16 %v1954, %v1950
        %v2071 = vpack.c.b16 %v1955, %v1951
        %v2072 = vpack.c.b16 %v1956, %v1952
        %v2073 = vpack.c.b16 %v1957, %v1953
        %v2074 = vpack.c.b16 %v1962, %v1958
        %v2075 = vpack.c.b16 %v1963, %v1959
        %v2076 = vpack.c.b16 %v1964, %v1960
        %v2077 = vpack.c.b16 %v1965, %v1961
        %v2078 = vpack.c.b16 %v1970, %v1966
        %v2079 = vpack.c.b16 %v1971, %v1967
        %v2080 = vpack.c.b16 %v1972, %v1968
        %v2081 = vpack.c.b16 %v1973, %v1969
        %v2082 = vpack.c.b16 %v1978, %v1974
        %v2083 = vpack.c.b16 %v1979, %v1975
        %v2084 = vpack.c.b16 %v1980, %v1976
        %v2085 = vpack.c.b16 %v1981, %v1977
        %v2086 = vpack.c.b16 %v1986, %v1982
        %v2087 = vpack.c.b16 %v1987, %v1983
        %v2088 = vpack.c.b16 %v1988, %v1984
        %v2089 = vpack.c.b16 %v1989, %v1985
        %v2090 = vpack.c.b16 %v1994, %v1990
        %v2091 = vpack.c.b16 %v1995, %v1991
        %v2092 = vpack.c.b16 %v1996, %v1992
        %v2093 = vpack.c.b16 %v1997, %v1993
        %v2094 = vpack.c.b16 %v2002, %v1998
        %v2095 = vpack.c.b16 %v2003, %v1999
        %v2096 = vpack.c.b16 %v2004, %v2000
        %v2097 = vpack.c.b16 %v2005, %v2001
        %v2098 = vpack.c.b16 %v2010, %v2006
        %v2099 = vpack.c.b16 %v2011, %v2007
        %v2100 = vpack.c.b16 %v2012, %v2008
        %v2101 = vpack.c.b16 %v2013, %v2009
        %v2102 = vpack.c.b16 %v2018, %v2014
        %v2103 = vpack.c.b16 %v2019, %v2015
        %v2104 = vpack.c.b16 %v2020, %v2016
        %v2105 = vpack.c.b16 %v2021, %v2017
        %v2106 = vpack.c.b16 %v2026, %v2022
        %v2107 = vpack.c.b16 %v2027, %v2023
        %v2108 = vpack.c.b16 %v2028, %v2024
        %v2109 = vpack.c.b16 %v2029, %v2025
        %v2110 = vpack.c.b16 %v2034, %v2030
        %v2111 = vpack.c.b16 %v2035, %v2031
        %v2112 = vpack.c.b16 %v2036, %v2032
        %v2113 = vpack.c.b16 %v2037, %v2033
        %v2114 = vpack.c.b16 %v2042, %v2038
        %v2115 = vpack.c.b16 %v2043, %v2039
        %v2116 = vpack.c.b16 %v2044, %v2040
        %v2117 = vpack.c.b16 %v2045, %v2041
        %v2118 = vpack.c.b16 %v2050, %v2046
        %v2119 = vpack.c.b16 %v2051, %v2047
        %v2120 = vpack.c.b16 %v2052, %v2048
        %v2121 = vpack.c.b16 %v2053, %v2049
        %v2122 = vpack.c.b16 %v2058, %v2054
        %v2123 = vpack.c.b16 %v2059, %v2055
        %v2124 = vpack.c.b16 %v2060, %v2056
        %v2125 = vpack.c.b16 %v2061, %v2057
        %2190 = vmatprep.subr.bf16.mxu0 %v2091
        %2191 = vmatpush1.bf16.msra.mxu0 %v2090
        %2192 = vmatprep.subr.bf16.mxu0 %v2087
        %2193 = vmatpush1.bf16.msra.mxu0 %v2086
        %2194 = vmatprep.subr.bf16.mxu0 %v2083
        %2195 = vmatpush1.bf16.msra.mxu0 %v2082
        %2196 = vmatprep.subr.bf16.mxu0 %v2079
        %2197 = vmatpush1.bf16.msra.mxu0 %v2078
        %2198 = vmatprep.subr.bf16.mxu0 %v2075
        %2199 = vmatpush1.bf16.msra.mxu0 %v2074
        %2200 = vmatprep.subr.bf16.mxu0 %v2071
        %2201 = vmatpush1.bf16.msra.mxu0 %v2070
        %2202 = vmatprep.subr.bf16.mxu0 %v2067
        %2203 = vmatpush1.bf16.msra.mxu0 %v2066
        %2204 = vmatprep.subr.bf16.mxu0 %v2063
        %2205 = vmatpush1.bf16.msra.mxu0 %v2062
        %2206 = vmatprep.subr.bf16.mxu0 %v2123
        %2207 = vmatpush2.bf16.msra.mxu0 %v2122
        %2208 = vmatprep.subr.bf16.mxu0 %v2119
        %2209 = vmatpush2.bf16.msra.mxu0 %v2118
        %2210 = vmatprep.subr.bf16.mxu0 %v2115
        %2211 = vmatpush2.bf16.msra.mxu0 %v2114
        %2212 = vmatprep.subr.bf16.mxu0 %v2111
        %2213 = vmatpush2.bf16.msra.mxu0 %v2110
        %2214 = vmatprep.subr.bf16.mxu0 %v2107
        %2215 = vmatpush2.bf16.msra.mxu0 %v2106
        %2216 = vmatprep.subr.bf16.mxu0 %v2103
        %2217 = vmatpush2.bf16.msra.mxu0 %v2102
        %2218 = vmatprep.subr.bf16.mxu0 %v2099
        %2219 = vmatpush2.bf16.msra.mxu0 %v2098
        %2220 = vmatprep.subr.bf16.mxu0 %v2095
        %2221 = vmatpush2.bf16.msra.mxu0 %v2094
        %2222 = vmatprep.mubr.bf16.mxu0 %v1783
        %2223 = vmatmul.mubr.bf16.gmra.mxu0 %v1782
        %v2224 = vpop.f32.mrf.mxu0
        %v2225 = vadd.f32 %v1853, %v2224
        %v2226 = vpop.f32.mrf.mxu0
        %v2227 = vadd.f32 %v1857, %v2226
        %v2228 = vpop.f32.mrf.mxu0
        %v2229 = vpop.f32.mrf.mxu0
        %2230 = vdwg.mxu0
        %2231 = vmatprep.subr.bf16.mxu0 %v2093
        %2232 = vmatpush1.bf16.msra.mxu0 %v2092
        %2233 = vmatprep.subr.bf16.mxu0 %v2089
        %2234 = vmatpush1.bf16.msra.mxu0 %v2088
        %2235 = vmatprep.subr.bf16.mxu0 %v2085
        %2236 = vmatpush1.bf16.msra.mxu0 %v2084
        %2237 = vmatprep.subr.bf16.mxu0 %v2081
        %2238 = vmatpush1.bf16.msra.mxu0 %v2080
        %2239 = vmatprep.subr.bf16.mxu0 %v2077
        %2240 = vmatpush1.bf16.msra.mxu0 %v2076
        %2241 = vmatprep.subr.bf16.mxu0 %v2073
        %2242 = vmatpush1.bf16.msra.mxu0 %v2072
        %2243 = vmatprep.subr.bf16.mxu0 %v2069
        %2244 = vmatpush1.bf16.msra.mxu0 %v2068
        %2245 = vmatprep.subr.bf16.mxu0 %v2065
        %2246 = vmatpush1.bf16.msra.mxu0 %v2064
        %2247 = vmatprep.subr.bf16.mxu0 %v2125
        %2248 = vmatpush2.bf16.msra.mxu0 %v2124
        %2249 = vmatprep.subr.bf16.mxu0 %v2121
        %2250 = vmatpush2.bf16.msra.mxu0 %v2120
        %2251 = vmatprep.subr.bf16.mxu0 %v2117
        %2252 = vmatpush2.bf16.msra.mxu0 %v2116
        %2253 = vmatprep.subr.bf16.mxu0 %v2113
        %2254 = vmatpush2.bf16.msra.mxu0 %v2112
        %2255 = vmatprep.subr.bf16.mxu0 %v2109
        %2256 = vmatpush2.bf16.msra.mxu0 %v2108
        %2257 = vmatprep.subr.bf16.mxu0 %v2105
        %2258 = vmatpush2.bf16.msra.mxu0 %v2104
        %2259 = vmatprep.subr.bf16.mxu0 %v2101
        %2260 = vmatpush2.bf16.msra.mxu0 %v2100
        %2261 = vmatprep.subr.bf16.mxu0 %v2097
        %2262 = vmatpush2.bf16.msra.mxu0 %v2096
        %2263 = vmatprep.mubr.bf16.mxu0 %v1783
        %2264 = vmatmul.mubr.bf16.gmra.mxu0 %v1782
        %v2265 = vpop.f32.mrf.mxu0
        %v2266 = vadd.f32 %v1861, %v2265
        %v2267 = vpop.f32.mrf.mxu0
        %v2268 = vadd.f32 %v1865, %v2267
        %v2269 = vpop.f32.mrf.mxu0
        %v2270 = vpop.f32.mrf.mxu0
        %2271 = vdwg.mxu0
        %vm2272 = vcmp.ge.f32.partialorder %v2225, 0.0
        %vm2273 = vcmp.ge.f32.partialorder %v2227, 0.0
        %vm2274 = vcmp.ge.f32.partialorder %v2266, 0.0
        %vm2275 = vcmp.ge.f32.partialorder %v2268, 0.0
        %v2276 = vmul.f32 %v2225, 0.01
        %v2277 = vmul.f32 %v2227, 0.01
        %v2278 = vmul.f32 %v2266, 0.01
        %v2279 = vmul.f32 %v2268, 0.01
        %v2280 = vsel %vm2272, %v2225, %v2276
        %v2281 = vsel %vm2273, %v2227, %v2277
        %v2282 = vsel %vm2274, %v2266, %v2278
        %v2283 = vsel %vm2275, %v2268, %v2279
        %v2284 = vld [vmem:[#allocation10 + $0x16] sm:$0xf]
        %v2285 = vld [vmem:[#allocation10 + $0x1a] sm:$0xf]
        %v2286 = vadd.f32 %v2280, %v2281
        %v2287 = vadd.f32 %v2286, %v2282
        %v2288 = vadd.f32 %v2287, %v2283
        %2289 = vadd.xlane.f32.xlu0 %v2288
        %v2290 = vpop.xlane.xlu0 %2289
        %v2291 = vrcp.pop 512.0
        %v2292 = vmul.f32 %v2290, %v2291
        %v2293 = vsub.f32 %v2280, %v2292
        %v2294 = vsub.f32 %v2281, %v2292
        %v2295 = vsub.f32 %v2282, %v2292
        %v2296 = vsub.f32 %v2283, %v2292
        %v2297 = vmul.f32 %v2293, %v2293
        %v2298 = vmul.f32 %v2294, %v2294
        %v2299 = vmul.f32 %v2295, %v2295
        %v2300 = vmul.f32 %v2296, %v2296
        %v2301 = vadd.f32 %v2297, %v2298
        %v2302 = vadd.f32 %v2301, %v2299
        %v2303 = vadd.f32 %v2302, %v2300
        %2304 = vadd.xlane.f32.xlu0 %v2303
        %v2305 = vpop.xlane.xlu0 %2304
        %v2306 = vmul.f32 %v2305, %v2291
        %v2307 = vadd.f32 %v2306, 1e-05
        %v2308 = vrsqrt.pop %v2307
        %v2309 = vmul.f32 %v2293, %v2308
        %v2310 = vmul.f32 %v2294, %v2308
        %v2311 = vmul.f32 %v2295, %v2308
        %v2312 = vmul.f32 %v2296, %v2308
        %v2314 = vlaneseq
        %v2315 = vshrl.u32 %v2314, 7
        %v2316 = vsub.s32 0, %v2315
        %v2317 = vrot.slane %v2284, %v2316
        %v2318 = vlaneseq
        %v2319 = vshrl.u32 %v2318, 7
        %v2320 = vsub.s32 1, %v2319
        %v2321 = vrot.slane %v2284, %v2320
        %v2322 = vlaneseq
        %v2323 = vshrl.u32 %v2322, 7
        %v2324 = vsub.s32 2, %v2323
        %v2325 = vrot.slane %v2284, %v2324
        %v2326 = vlaneseq
        %v2327 = vshrl.u32 %v2326, 7
        %v2328 = vsub.s32 3, %v2327
        %v2329 = vrot.slane %v2284, %v2328
        %v2334 = vmul.f32 %v2309, %v2317
        %v2335 = vmul.f32 %v2310, %v2321
        %v2336 = vmul.f32 %v2311, %v2325
        %v2337 = vmul.f32 %v2312, %v2329
        %v2339 = vlaneseq
        %v2340 = vshrl.u32 %v2339, 7
        %v2341 = vsub.s32 0, %v2340
        %v2342 = vrot.slane %v2285, %v2341
        %v2343 = vlaneseq
        %v2344 = vshrl.u32 %v2343, 7
        %v2345 = vsub.s32 1, %v2344
        %v2346 = vrot.slane %v2285, %v2345
        %v2347 = vlaneseq
        %v2348 = vshrl.u32 %v2347, 7
        %v2349 = vsub.s32 2, %v2348
        %v2350 = vrot.slane %v2285, %v2349
        %v2351 = vlaneseq
        %v2352 = vshrl.u32 %v2351, 7
        %v2353 = vsub.s32 3, %v2352
        %v2354 = vrot.slane %v2285, %v2353
        %v2359 = vadd.f32 %v2334, %v2342
        %v2360 = vadd.f32 %v2335, %v2346
        %v2361 = vadd.f32 %v2336, %v2350
        %v2362 = vadd.f32 %v2337, %v2354
        %v2363 = vpack.c.bf16 %v2359, %v2359
        %v2364 = vpack.c.bf16 %v2360, %v2360
        %v2365 = vpack.c.bf16 %v2361, %v2361
        %v2366 = vpack.c.bf16 %v2362, %v2362
        %v2367 = vld [vmem:[#allocation7 + $0x8] sm:$0xff]
        %v2368 = vld [vmem:[#allocation7 + $0x18] sm:$0xff]
        %v2369 = vld [vmem:[#allocation7 + $0x28] sm:$0xff]
        %v2370 = vld [vmem:[#allocation7 + $0x38] sm:$0xff]
        %v2371 = vld [vmem:[#allocation7 + $0x48] sm:$0xff]
        %v2372 = vld [vmem:[#allocation7 + $0x58] sm:$0xff]
        %v2373 = vld [vmem:[#allocation7 + $0x68] sm:$0xff]
        %v2374 = vld [vmem:[#allocation7 + $0x78] sm:$0xff]
        %v2375 = vld [vmem:[#allocation7 + $0x88] sm:$0xff]
        %v2376 = vld [vmem:[#allocation7 + $0x98] sm:$0xff]
        %v2377 = vld [vmem:[#allocation7 + $0xa8] sm:$0xff]
        %v2378 = vld [vmem:[#allocation7 + $0xb8] sm:$0xff]
        %v2379 = vld [vmem:[#allocation7 + $0xc8] sm:$0xff]
        %v2380 = vld [vmem:[#allocation7 + $0xd8] sm:$0xff]
        %v2381 = vld [vmem:[#allocation7 + $0xe8] sm:$0xff]
        %v2382 = vld [vmem:[#allocation7 + $0xf8] sm:$0xff]
        %v2383 = vld [vmem:[#allocation7 + $0x108] sm:$0xff]
        %v2384 = vld [vmem:[#allocation7 + $0x118] sm:$0xff]
        %v2385 = vld [vmem:[#allocation7 + $0x128] sm:$0xff]
        %v2386 = vld [vmem:[#allocation7 + $0x138] sm:$0xff]
        %v2387 = vld [vmem:[#allocation7 + $0x148] sm:$0xff]
        %v2388 = vld [vmem:[#allocation7 + $0x158] sm:$0xff]
        %v2389 = vld [vmem:[#allocation7 + $0x168] sm:$0xff]
        %v2390 = vld [vmem:[#allocation7 + $0x178] sm:$0xff]
        %v2391 = vld [vmem:[#allocation7 + $0x188] sm:$0xff]
        %v2392 = vld [vmem:[#allocation7 + $0x198] sm:$0xff]
        %v2393 = vld [vmem:[#allocation7 + $0x1a8] sm:$0xff]
        %v2394 = vld [vmem:[#allocation7 + $0x1b8] sm:$0xff]
        %v2395 = vld [vmem:[#allocation7 + $0x1c8] sm:$0xff]
        %v2396 = vld [vmem:[#allocation7 + $0x1d8] sm:$0xff]
        %v2397 = vld [vmem:[#allocation7 + $0x1e8] sm:$0xff]
        %v2398 = vld [vmem:[#allocation7 + $0x1f8] sm:$0xff]
        %v2399 = vld [vmem:[#allocation7 + $0x208] sm:$0xff]
        %v2400 = vld [vmem:[#allocation7 + $0x218] sm:$0xff]
        %v2401 = vld [vmem:[#allocation7 + $0x228] sm:$0xff]
        %v2402 = vld [vmem:[#allocation7 + $0x238] sm:$0xff]
        %v2403 = vld [vmem:[#allocation7 + $0x248] sm:$0xff]
        %v2404 = vld [vmem:[#allocation7 + $0x258] sm:$0xff]
        %v2405 = vld [vmem:[#allocation7 + $0x268] sm:$0xff]
        %v2406 = vld [vmem:[#allocation7 + $0x278] sm:$0xff]
        %v2407 = vld [vmem:[#allocation7 + $0x288] sm:$0xff]
        %v2408 = vld [vmem:[#allocation7 + $0x298] sm:$0xff]
        %v2409 = vld [vmem:[#allocation7 + $0x2a8] sm:$0xff]
        %v2410 = vld [vmem:[#allocation7 + $0x2b8] sm:$0xff]
        %v2411 = vld [vmem:[#allocation7 + $0x2c8] sm:$0xff]
        %v2412 = vld [vmem:[#allocation7 + $0x2d8] sm:$0xff]
        %v2413 = vld [vmem:[#allocation7 + $0x2e8] sm:$0xff]
        %v2414 = vld [vmem:[#allocation7 + $0x2f8] sm:$0xff]
        %v2415 = vld [vmem:[#allocation7 + $0x308] sm:$0xff]
        %v2416 = vld [vmem:[#allocation7 + $0x318] sm:$0xff]
        %v2417 = vld [vmem:[#allocation7 + $0x328] sm:$0xff]
        %v2418 = vld [vmem:[#allocation7 + $0x338] sm:$0xff]
        %v2419 = vld [vmem:[#allocation7 + $0x348] sm:$0xff]
        %v2420 = vld [vmem:[#allocation7 + $0x358] sm:$0xff]
        %v2421 = vld [vmem:[#allocation7 + $0x368] sm:$0xff]
        %v2422 = vld [vmem:[#allocation7 + $0x378] sm:$0xff]
        %v2423 = vld [vmem:[#allocation7 + $0x388] sm:$0xff]
        %v2424 = vld [vmem:[#allocation7 + $0x398] sm:$0xff]
        %v2425 = vld [vmem:[#allocation7 + $0x3a8] sm:$0xff]
        %v2426 = vld [vmem:[#allocation7 + $0x3b8] sm:$0xff]
        %v2427 = vld [vmem:[#allocation7 + $0x3c8] sm:$0xff]
        %v2428 = vld [vmem:[#allocation7 + $0x3d8] sm:$0xff]
        %v2429 = vld [vmem:[#allocation7 + $0x3e8] sm:$0xff]
        %v2430 = vld [vmem:[#allocation7 + $0x3f8] sm:$0xff]
        %v2431 = vld [vmem:[#allocation10 + $0x1e] sm:$0x3]
        %v2433 = vlaneseq
        %v2434 = vshrl.u32 %v2433, 7
        %v2435 = vsub.s32 0, %v2434
        %v2436 = vrot.slane %v2431, %v2435
        %v2437 = vlaneseq
        %v2438 = vshrl.u32 %v2437, 7
        %v2439 = vsub.s32 1, %v2438
        %v2440 = vrot.slane %v2431, %v2439
        %v2507 = vunpack.c.l.b16 %v2367
        %v2508 = vunpack.c.h.b16 %v2367
        %v2509 = vunpack.c.l.b16 %v2368
        %v2510 = vunpack.c.h.b16 %v2368
        %v2511 = vunpack.c.l.b16 %v2369
        %v2512 = vunpack.c.h.b16 %v2369
        %v2513 = vunpack.c.l.b16 %v2370
        %v2514 = vunpack.c.h.b16 %v2370
        %v2515 = vunpack.c.l.b16 %v2371
        %v2516 = vunpack.c.h.b16 %v2371
        %v2517 = vunpack.c.l.b16 %v2372
        %v2518 = vunpack.c.h.b16 %v2372
        %v2519 = vunpack.c.l.b16 %v2373
        %v2520 = vunpack.c.h.b16 %v2373
        %v2521 = vunpack.c.l.b16 %v2374
        %v2522 = vunpack.c.h.b16 %v2374
        %v2523 = vunpack.c.l.b16 %v2375
        %v2524 = vunpack.c.h.b16 %v2375
        %v2525 = vunpack.c.l.b16 %v2376
        %v2526 = vunpack.c.h.b16 %v2376
        %v2527 = vunpack.c.l.b16 %v2377
        %v2528 = vunpack.c.h.b16 %v2377
        %v2529 = vunpack.c.l.b16 %v2378
        %v2530 = vunpack.c.h.b16 %v2378
        %v2531 = vunpack.c.l.b16 %v2379
        %v2532 = vunpack.c.h.b16 %v2379
        %v2533 = vunpack.c.l.b16 %v2380
        %v2534 = vunpack.c.h.b16 %v2380
        %v2535 = vunpack.c.l.b16 %v2381
        %v2536 = vunpack.c.h.b16 %v2381
        %v2537 = vunpack.c.l.b16 %v2382
        %v2538 = vunpack.c.h.b16 %v2382
        %v2539 = vunpack.c.l.b16 %v2383
        %v2540 = vunpack.c.h.b16 %v2383
        %v2541 = vunpack.c.l.b16 %v2384
        %v2542 = vunpack.c.h.b16 %v2384
        %v2543 = vunpack.c.l.b16 %v2385
        %v2544 = vunpack.c.h.b16 %v2385
        %v2545 = vunpack.c.l.b16 %v2386
        %v2546 = vunpack.c.h.b16 %v2386
        %v2547 = vunpack.c.l.b16 %v2387
        %v2548 = vunpack.c.h.b16 %v2387
        %v2549 = vunpack.c.l.b16 %v2388
        %v2550 = vunpack.c.h.b16 %v2388
        %v2551 = vunpack.c.l.b16 %v2389
        %v2552 = vunpack.c.h.b16 %v2389
        %v2553 = vunpack.c.l.b16 %v2390
        %v2554 = vunpack.c.h.b16 %v2390
        %v2555 = vunpack.c.l.b16 %v2391
        %v2556 = vunpack.c.h.b16 %v2391
        %v2557 = vunpack.c.l.b16 %v2392
        %v2558 = vunpack.c.h.b16 %v2392
        %v2559 = vunpack.c.l.b16 %v2393
        %v2560 = vunpack.c.h.b16 %v2393
        %v2561 = vunpack.c.l.b16 %v2394
        %v2562 = vunpack.c.h.b16 %v2394
        %v2563 = vunpack.c.l.b16 %v2395
        %v2564 = vunpack.c.h.b16 %v2395
        %v2565 = vunpack.c.l.b16 %v2396
        %v2566 = vunpack.c.h.b16 %v2396
        %v2567 = vunpack.c.l.b16 %v2397
        %v2568 = vunpack.c.h.b16 %v2397
        %v2569 = vunpack.c.l.b16 %v2398
        %v2570 = vunpack.c.h.b16 %v2398
        %v2571 = vunpack.c.l.b16 %v2399
        %v2572 = vunpack.c.h.b16 %v2399
        %v2573 = vunpack.c.l.b16 %v2400
        %v2574 = vunpack.c.h.b16 %v2400
        %v2575 = vunpack.c.l.b16 %v2401
        %v2576 = vunpack.c.h.b16 %v2401
        %v2577 = vunpack.c.l.b16 %v2402
        %v2578 = vunpack.c.h.b16 %v2402
        %v2579 = vunpack.c.l.b16 %v2403
        %v2580 = vunpack.c.h.b16 %v2403
        %v2581 = vunpack.c.l.b16 %v2404
        %v2582 = vunpack.c.h.b16 %v2404
        %v2583 = vunpack.c.l.b16 %v2405
        %v2584 = vunpack.c.h.b16 %v2405
        %v2585 = vunpack.c.l.b16 %v2406
        %v2586 = vunpack.c.h.b16 %v2406
        %v2587 = vunpack.c.l.b16 %v2407
        %v2588 = vunpack.c.h.b16 %v2407
        %v2589 = vunpack.c.l.b16 %v2408
        %v2590 = vunpack.c.h.b16 %v2408
        %v2591 = vunpack.c.l.b16 %v2409
        %v2592 = vunpack.c.h.b16 %v2409
        %v2593 = vunpack.c.l.b16 %v2410
        %v2594 = vunpack.c.h.b16 %v2410
        %v2595 = vunpack.c.l.b16 %v2411
        %v2596 = vunpack.c.h.b16 %v2411
        %v2597 = vunpack.c.l.b16 %v2412
        %v2598 = vunpack.c.h.b16 %v2412
        %v2599 = vunpack.c.l.b16 %v2413
        %v2600 = vunpack.c.h.b16 %v2413
        %v2601 = vunpack.c.l.b16 %v2414
        %v2602 = vunpack.c.h.b16 %v2414
        %v2603 = vunpack.c.l.b16 %v2415
        %v2604 = vunpack.c.h.b16 %v2415
        %v2605 = vunpack.c.l.b16 %v2416
        %v2606 = vunpack.c.h.b16 %v2416
        %v2607 = vunpack.c.l.b16 %v2417
        %v2608 = vunpack.c.h.b16 %v2417
        %v2609 = vunpack.c.l.b16 %v2418
        %v2610 = vunpack.c.h.b16 %v2418
        %v2611 = vunpack.c.l.b16 %v2419
        %v2612 = vunpack.c.h.b16 %v2419
        %v2613 = vunpack.c.l.b16 %v2420
        %v2614 = vunpack.c.h.b16 %v2420
        %v2615 = vunpack.c.l.b16 %v2421
        %v2616 = vunpack.c.h.b16 %v2421
        %v2617 = vunpack.c.l.b16 %v2422
        %v2618 = vunpack.c.h.b16 %v2422
        %v2619 = vunpack.c.l.b16 %v2423
        %v2620 = vunpack.c.h.b16 %v2423
        %v2621 = vunpack.c.l.b16 %v2424
        %v2622 = vunpack.c.h.b16 %v2424
        %v2623 = vunpack.c.l.b16 %v2425
        %v2624 = vunpack.c.h.b16 %v2425
        %v2625 = vunpack.c.l.b16 %v2426
        %v2626 = vunpack.c.h.b16 %v2426
        %v2627 = vunpack.c.l.b16 %v2427
        %v2628 = vunpack.c.h.b16 %v2427
        %v2629 = vunpack.c.l.b16 %v2428
        %v2630 = vunpack.c.h.b16 %v2428
        %v2631 = vunpack.c.l.b16 %v2429
        %v2632 = vunpack.c.h.b16 %v2429
        %v2633 = vunpack.c.l.b16 %v2430
        %v2634 = vunpack.c.h.b16 %v2430
        %v2635 = vpack.c.b16 %v2509, %v2507
        %v2636 = vpack.c.b16 %v2510, %v2508
        %v2637 = vpack.c.b16 %v2513, %v2511
        %v2638 = vpack.c.b16 %v2514, %v2512
        %v2639 = vpack.c.b16 %v2517, %v2515
        %v2640 = vpack.c.b16 %v2518, %v2516
        %v2641 = vpack.c.b16 %v2521, %v2519
        %v2642 = vpack.c.b16 %v2522, %v2520
        %v2643 = vpack.c.b16 %v2525, %v2523
        %v2644 = vpack.c.b16 %v2526, %v2524
        %v2645 = vpack.c.b16 %v2529, %v2527
        %v2646 = vpack.c.b16 %v2530, %v2528
        %v2647 = vpack.c.b16 %v2533, %v2531
        %v2648 = vpack.c.b16 %v2534, %v2532
        %v2649 = vpack.c.b16 %v2537, %v2535
        %v2650 = vpack.c.b16 %v2538, %v2536
        %v2651 = vpack.c.b16 %v2541, %v2539
        %v2652 = vpack.c.b16 %v2542, %v2540
        %v2653 = vpack.c.b16 %v2545, %v2543
        %v2654 = vpack.c.b16 %v2546, %v2544
        %v2655 = vpack.c.b16 %v2549, %v2547
        %v2656 = vpack.c.b16 %v2550, %v2548
        %v2657 = vpack.c.b16 %v2553, %v2551
        %v2658 = vpack.c.b16 %v2554, %v2552
        %v2659 = vpack.c.b16 %v2557, %v2555
        %v2660 = vpack.c.b16 %v2558, %v2556
        %v2661 = vpack.c.b16 %v2561, %v2559
        %v2662 = vpack.c.b16 %v2562, %v2560
        %v2663 = vpack.c.b16 %v2565, %v2563
        %v2664 = vpack.c.b16 %v2566, %v2564
        %v2665 = vpack.c.b16 %v2569, %v2567
        %v2666 = vpack.c.b16 %v2570, %v2568
        %v2667 = vpack.c.b16 %v2573, %v2571
        %v2668 = vpack.c.b16 %v2574, %v2572
        %v2669 = vpack.c.b16 %v2577, %v2575
        %v2670 = vpack.c.b16 %v2578, %v2576
        %v2671 = vpack.c.b16 %v2581, %v2579
        %v2672 = vpack.c.b16 %v2582, %v2580
        %v2673 = vpack.c.b16 %v2585, %v2583
        %v2674 = vpack.c.b16 %v2586, %v2584
        %v2675 = vpack.c.b16 %v2589, %v2587
        %v2676 = vpack.c.b16 %v2590, %v2588
        %v2677 = vpack.c.b16 %v2593, %v2591
        %v2678 = vpack.c.b16 %v2594, %v2592
        %v2679 = vpack.c.b16 %v2597, %v2595
        %v2680 = vpack.c.b16 %v2598, %v2596
        %v2681 = vpack.c.b16 %v2601, %v2599
        %v2682 = vpack.c.b16 %v2602, %v2600
        %v2683 = vpack.c.b16 %v2605, %v2603
        %v2684 = vpack.c.b16 %v2606, %v2604
        %v2685 = vpack.c.b16 %v2609, %v2607
        %v2686 = vpack.c.b16 %v2610, %v2608
        %v2687 = vpack.c.b16 %v2613, %v2611
        %v2688 = vpack.c.b16 %v2614, %v2612
        %v2689 = vpack.c.b16 %v2617, %v2615
        %v2690 = vpack.c.b16 %v2618, %v2616
        %v2691 = vpack.c.b16 %v2621, %v2619
        %v2692 = vpack.c.b16 %v2622, %v2620
        %v2693 = vpack.c.b16 %v2625, %v2623
        %v2694 = vpack.c.b16 %v2626, %v2624
        %v2695 = vpack.c.b16 %v2629, %v2627
        %v2696 = vpack.c.b16 %v2630, %v2628
        %v2697 = vpack.c.b16 %v2633, %v2631
        %v2698 = vpack.c.b16 %v2634, %v2632
        %2763 = vmatprep.subr.bf16.mxu0 %v2650
        %2764 = vmatpush1.bf16.msra.mxu0 %v2649
        %2765 = vmatprep.subr.bf16.mxu0 %v2648
        %2766 = vmatpush1.bf16.msra.mxu0 %v2647
        %2767 = vmatprep.subr.bf16.mxu0 %v2646
        %2768 = vmatpush1.bf16.msra.mxu0 %v2645
        %2769 = vmatprep.subr.bf16.mxu0 %v2644
        %2770 = vmatpush1.bf16.msra.mxu0 %v2643
        %2771 = vmatprep.subr.bf16.mxu0 %v2642
        %2772 = vmatpush1.bf16.msra.mxu0 %v2641
        %2773 = vmatprep.subr.bf16.mxu0 %v2640
        %2774 = vmatpush1.bf16.msra.mxu0 %v2639
        %2775 = vmatprep.subr.bf16.mxu0 %v2638
        %2776 = vmatpush1.bf16.msra.mxu0 %v2637
        %2777 = vmatprep.subr.bf16.mxu0 %v2636
        %2778 = vmatpush1.bf16.msra.mxu0 %v2635
        %2779 = vmatprep.subr.bf16.mxu0 %v2666
        %2780 = vmatpush2.bf16.msra.mxu0 %v2665
        %2781 = vmatprep.subr.bf16.mxu0 %v2664
        %2782 = vmatpush2.bf16.msra.mxu0 %v2663
        %2783 = vmatprep.subr.bf16.mxu0 %v2662
        %2784 = vmatpush2.bf16.msra.mxu0 %v2661
        %2785 = vmatprep.subr.bf16.mxu0 %v2660
        %2786 = vmatpush2.bf16.msra.mxu0 %v2659
        %2787 = vmatprep.subr.bf16.mxu0 %v2658
        %2788 = vmatpush2.bf16.msra.mxu0 %v2657
        %2789 = vmatprep.subr.bf16.mxu0 %v2656
        %2790 = vmatpush2.bf16.msra.mxu0 %v2655
        %2791 = vmatprep.subr.bf16.mxu0 %v2654
        %2792 = vmatpush2.bf16.msra.mxu0 %v2653
        %2793 = vmatprep.subr.bf16.mxu0 %v2652
        %2794 = vmatpush2.bf16.msra.mxu0 %v2651
        %2795 = vmatprep.mubr.bf16.mxu0 %v2364
        %2796 = vmatmul.mubr.bf16.gmra.mxu0 %v2363
        %v2797 = vpop.f32.mrf.mxu0
        %v2798 = vadd.f32 %v2436, %v2797
        %v2799 = vpop.f32.mrf.mxu0
        %v2800 = vadd.f32 %v2440, %v2799
        %v2801 = vpop.f32.mrf.mxu0
        %v2802 = vpop.f32.mrf.mxu0
        %2803 = vdwg.mxu0
        %2804 = vmatprep.subr.bf16.mxu0 %v2682
        %2805 = vmatpush1.bf16.msra.mxu0 %v2681
        %2806 = vmatprep.subr.bf16.mxu0 %v2680
        %2807 = vmatpush1.bf16.msra.mxu0 %v2679
        %2808 = vmatprep.subr.bf16.mxu0 %v2678
        %2809 = vmatpush1.bf16.msra.mxu0 %v2677
        %2810 = vmatprep.subr.bf16.mxu0 %v2676
        %2811 = vmatpush1.bf16.msra.mxu0 %v2675
        %2812 = vmatprep.subr.bf16.mxu0 %v2674
        %2813 = vmatpush1.bf16.msra.mxu0 %v2673
        %2814 = vmatprep.subr.bf16.mxu0 %v2672
        %2815 = vmatpush1.bf16.msra.mxu0 %v2671
        %2816 = vmatprep.subr.bf16.mxu0 %v2670
        %2817 = vmatpush1.bf16.msra.mxu0 %v2669
        %2818 = vmatprep.subr.bf16.mxu0 %v2668
        %2819 = vmatpush1.bf16.msra.mxu0 %v2667
        %2820 = vmatprep.subr.bf16.mxu0 %v2698
        %2821 = vmatpush2.bf16.msra.mxu0 %v2697
        %2822 = vmatprep.subr.bf16.mxu0 %v2696
        %2823 = vmatpush2.bf16.msra.mxu0 %v2695
        %2824 = vmatprep.subr.bf16.mxu0 %v2694
        %2825 = vmatpush2.bf16.msra.mxu0 %v2693
        %2826 = vmatprep.subr.bf16.mxu0 %v2692
        %2827 = vmatpush2.bf16.msra.mxu0 %v2691
        %2828 = vmatprep.subr.bf16.mxu0 %v2690
        %2829 = vmatpush2.bf16.msra.mxu0 %v2689
        %2830 = vmatprep.subr.bf16.mxu0 %v2688
        %2831 = vmatpush2.bf16.msra.mxu0 %v2687
        %2832 = vmatprep.subr.bf16.mxu0 %v2686
        %2833 = vmatpush2.bf16.msra.mxu0 %v2685
        %2834 = vmatprep.subr.bf16.mxu0 %v2684
        %2835 = vmatpush2.bf16.msra.mxu0 %v2683
        %2836 = vmatprep.mubr.bf16.mxu0 %v2366
        %2837 = vmatmul.mubr.bf16.gmra.mxu0 %v2365
        %v2838 = vpop.f32.mrf.mxu0
        %v2839 = vadd.f32 %v2798, %v2838
        %v2840 = vpop.f32.mrf.mxu0
        %v2841 = vadd.f32 %v2800, %v2840
        %v2842 = vpop.f32.mrf.mxu0
        %v2843 = vpop.f32.mrf.mxu0
        %2844 = vdwg.mxu0
        %vm2845 = vcmp.ge.f32.partialorder %v2839, 0.0
        %vm2846 = vcmp.ge.f32.partialorder %v2841, 0.0
        %v2847 = vmul.f32 %v2839, 0.01
        %v2848 = vmul.f32 %v2841, 0.01
        %v2849 = vsel %vm2845, %v2839, %v2847
        %v2850 = vsel %vm2846, %v2841, %v2848
        %v2851 = vld [vmem:[#allocation10 + $0x20] sm:$0x3]
        %v2852 = vld [vmem:[#allocation10 + $0x22] sm:$0x3]
        %v2853 = vadd.f32 %v2849, %v2850
        %2854 = vadd.xlane.f32.xlu0 %v2853
        %v2855 = vpop.xlane.xlu0 %2854
        %v2856 = vmul.f32 %v2855, %v1742
        %v2857 = vsub.f32 %v2849, %v2856
        %v2858 = vsub.f32 %v2850, %v2856
        %v2859 = vmul.f32 %v2857, %v2857
        %v2860 = vmul.f32 %v2858, %v2858
        %v2861 = vadd.f32 %v2859, %v2860
        %2862 = vadd.xlane.f32.xlu0 %v2861
        %v2863 = vpop.xlane.xlu0 %2862
        %v2864 = vmul.f32 %v2863, %v1742
        %v2865 = vadd.f32 %v2864, 1e-05
        %v2866 = vrsqrt.pop %v2865
        %v2867 = vmul.f32 %v2857, %v2866
        %v2868 = vmul.f32 %v2858, %v2866
        %v2870 = vlaneseq
        %v2871 = vshrl.u32 %v2870, 7
        %v2872 = vsub.s32 0, %v2871
        %v2873 = vrot.slane %v2851, %v2872
        %v2874 = vlaneseq
        %v2875 = vshrl.u32 %v2874, 7
        %v2876 = vsub.s32 1, %v2875
        %v2877 = vrot.slane %v2851, %v2876
        %v2880 = vmul.f32 %v2867, %v2873
        %v2881 = vmul.f32 %v2868, %v2877
        %v2883 = vlaneseq
        %v2884 = vshrl.u32 %v2883, 7
        %v2885 = vsub.s32 0, %v2884
        %v2886 = vrot.slane %v2852, %v2885
        %v2887 = vlaneseq
        %v2888 = vshrl.u32 %v2887, 7
        %v2889 = vsub.s32 1, %v2888
        %v2890 = vrot.slane %v2852, %v2889
        %v2893 = vadd.f32 %v2880, %v2886
        %v2894 = vadd.f32 %v2881, %v2890
        %v2895 = vpack.c.bf16 %v2893, %v2893
        %v2896 = vpack.c.bf16 %v2894, %v2894
        %v2897 = vld [vmem:[#allocation8 + $0x10] sm:$0xf]
        %v2898 = vld [vmem:[#allocation8 + $0x24] sm:$0xf]
        %v2899 = vld [vmem:[#allocation8 + $0x38] sm:$0xf]
        %v2900 = vld [vmem:[#allocation8 + $0x4c] sm:$0xf]
        %v2901 = vld [vmem:[#allocation8 + $0x60] sm:$0xf]
        %v2902 = vld [vmem:[#allocation8 + $0x74] sm:$0xf]
        %v2903 = vld [vmem:[#allocation8 + $0x88] sm:$0xf]
        %v2904 = vld [vmem:[#allocation8 + $0x9c] sm:$0xf]
        %v2905 = vld [vmem:[#allocation8 + $0xb0] sm:$0xf]
        %v2906 = vld [vmem:[#allocation8 + $0xc4] sm:$0xf]
        %v2907 = vld [vmem:[#allocation8 + $0xd8] sm:$0xf]
        %v2908 = vld [vmem:[#allocation8 + $0xec] sm:$0xf]
        %v2909 = vld [vmem:[#allocation8 + $0x100] sm:$0xf]
        %v2910 = vld [vmem:[#allocation8 + $0x114] sm:$0xf]
        %v2911 = vld [vmem:[#allocation8 + $0x128] sm:$0xf]
        %v2912 = vld [vmem:[#allocation8 + $0x13c] sm:$0xf]
        %v2913 = vld [vmem:[#allocation8 + $0x150] sm:$0xf]
        %v2914 = vld [vmem:[#allocation8 + $0x164] sm:$0xf]
        %v2915 = vld [vmem:[#allocation8 + $0x178] sm:$0xf]
        %v2916 = vld [vmem:[#allocation8 + $0x18c] sm:$0xf]
        %v2917 = vld [vmem:[#allocation8 + $0x1a0] sm:$0xf]
        %v2918 = vld [vmem:[#allocation8 + $0x1b4] sm:$0xf]
        %v2919 = vld [vmem:[#allocation8 + $0x1c8] sm:$0xf]
        %v2920 = vld [vmem:[#allocation8 + $0x1dc] sm:$0xf]
        %v2921 = vld [vmem:[#allocation8 + $0x1f0] sm:$0xf]
        %v2922 = vld [vmem:[#allocation8 + $0x204] sm:$0xf]
        %v2923 = vld [vmem:[#allocation8 + $0x218] sm:$0xf]
        %v2924 = vld [vmem:[#allocation8 + $0x22c] sm:$0xf]
        %v2925 = vld [vmem:[#allocation8 + $0x240] sm:$0xf]
        %v2926 = vld [vmem:[#allocation8 + $0x254] sm:$0xf]
        %v2927 = vld [vmem:[#allocation8 + $0x268] sm:$0xf]
        %v2928 = vld [vmem:[#allocation8 + $0x27c] sm:$0xf]
        %v2929 = vld [vmem:[#allocation10 + $0x24] sm:$0x1]
        %v2931 = vlaneseq
        %v2932 = vshrl.u32 %v2931, 7
        %v2933 = vsub.s32 0, %v2932
        %v2934 = vrot.slane %v2929, %v2933
        %v2968 = vunpack.c.l.b16 %v2897
        %v2969 = vunpack.c.l.b16 %v2898
        %v2970 = vunpack.c.l.b16 %v2899
        %v2971 = vunpack.c.l.b16 %v2900
        %v2972 = vunpack.c.l.b16 %v2901
        %v2973 = vunpack.c.l.b16 %v2902
        %v2974 = vunpack.c.l.b16 %v2903
        %v2975 = vunpack.c.l.b16 %v2904
        %v2976 = vunpack.c.l.b16 %v2905
        %v2977 = vunpack.c.l.b16 %v2906
        %v2978 = vunpack.c.l.b16 %v2907
        %v2979 = vunpack.c.l.b16 %v2908
        %v2980 = vunpack.c.l.b16 %v2909
        %v2981 = vunpack.c.l.b16 %v2910
        %v2982 = vunpack.c.l.b16 %v2911
        %v2983 = vunpack.c.l.b16 %v2912
        %v2984 = vunpack.c.l.b16 %v2913
        %v2985 = vunpack.c.l.b16 %v2914
        %v2986 = vunpack.c.l.b16 %v2915
        %v2987 = vunpack.c.l.b16 %v2916
        %v2988 = vunpack.c.l.b16 %v2917
        %v2989 = vunpack.c.l.b16 %v2918
        %v2990 = vunpack.c.l.b16 %v2919
        %v2991 = vunpack.c.l.b16 %v2920
        %v2992 = vunpack.c.l.b16 %v2921
        %v2993 = vunpack.c.l.b16 %v2922
        %v2994 = vunpack.c.l.b16 %v2923
        %v2995 = vunpack.c.l.b16 %v2924
        %v2996 = vunpack.c.l.b16 %v2925
        %v2997 = vunpack.c.l.b16 %v2926
        %v2998 = vunpack.c.l.b16 %v2927
        %v2999 = vunpack.c.l.b16 %v2928
        %v3000 = vpack.c.b16 %v2969, %v2968
        %v3001 = vpack.c.b16 %v2971, %v2970
        %v3002 = vpack.c.b16 %v2973, %v2972
        %v3003 = vpack.c.b16 %v2975, %v2974
        %v3004 = vpack.c.b16 %v2977, %v2976
        %v3005 = vpack.c.b16 %v2979, %v2978
        %v3006 = vpack.c.b16 %v2981, %v2980
        %v3007 = vpack.c.b16 %v2983, %v2982
        %v3008 = vpack.c.b16 %v2985, %v2984
        %v3009 = vpack.c.b16 %v2987, %v2986
        %v3010 = vpack.c.b16 %v2989, %v2988
        %v3011 = vpack.c.b16 %v2991, %v2990
        %v3012 = vpack.c.b16 %v2993, %v2992
        %v3013 = vpack.c.b16 %v2995, %v2994
        %v3014 = vpack.c.b16 %v2997, %v2996
        %v3015 = vpack.c.b16 %v2999, %v2998
        %3032 = vmatprep.subr.bf16.mxu0 0
        %3033 = vmatpush1.bf16.msra.mxu0 %v3007
        %3034 = vmatprep.subr.bf16.mxu0 0
        %3035 = vmatpush1.bf16.msra.mxu0 %v3006
        %3036 = vmatprep.subr.bf16.mxu0 0
        %3037 = vmatpush1.bf16.msra.mxu0 %v3005
        %3038 = vmatprep.subr.bf16.mxu0 0
        %3039 = vmatpush1.bf16.msra.mxu0 %v3004
        %3040 = vmatprep.subr.bf16.mxu0 0
        %3041 = vmatpush1.bf16.msra.mxu0 %v3003
        %3042 = vmatprep.subr.bf16.mxu0 0
        %3043 = vmatpush1.bf16.msra.mxu0 %v3002
        %3044 = vmatprep.subr.bf16.mxu0 0
        %3045 = vmatpush1.bf16.msra.mxu0 %v3001
        %3046 = vmatprep.subr.bf16.mxu0 0
        %3047 = vmatpush1.bf16.msra.mxu0 %v3000
        %3048 = vmatprep.subr.bf16.mxu0 0
        %3049 = vmatpush2.bf16.msra.mxu0 %v3015
        %3050 = vmatprep.subr.bf16.mxu0 0
        %3051 = vmatpush2.bf16.msra.mxu0 %v3014
        %3052 = vmatprep.subr.bf16.mxu0 0
        %3053 = vmatpush2.bf16.msra.mxu0 %v3013
        %3054 = vmatprep.subr.bf16.mxu0 0
        %3055 = vmatpush2.bf16.msra.mxu0 %v3012
        %3056 = vmatprep.subr.bf16.mxu0 0
        %3057 = vmatpush2.bf16.msra.mxu0 %v3011
        %3058 = vmatprep.subr.bf16.mxu0 0
        %3059 = vmatpush2.bf16.msra.mxu0 %v3010
        %3060 = vmatprep.subr.bf16.mxu0 0
        %3061 = vmatpush2.bf16.msra.mxu0 %v3009
        %3062 = vmatprep.subr.bf16.mxu0 0
        %3063 = vmatpush2.bf16.msra.mxu0 %v3008
        %3064 = vmatprep.mubr.bf16.mxu0 %v2896
        %3065 = vmatmul.mubr.bf16.gmra.mxu0 %v2895
        %v3066 = vpop.f32.mrf.mxu0
        %v3067 = vadd.f32 %v2934, %v3066
        %v3068 = vpop.f32.mrf.mxu0
        %v3069 = vpop.f32.mrf.mxu0
        %v3070 = vpop.f32.mrf.mxu0
        %3071 = vdwg.mxu0
        %3072 = vst [vmem:[%s295] sm:$0xff] %v3067
        %s3073 = sand.u32 %s142, 1
        %s3074 = scalar_lea.sflag [#allocation4], %s3073
        %s3075 = sand.u32 %s142, 1
        %s3076 = smul.addr %s3075, 8
        %s3077 = scalar_lea.vmem [#allocation11], %s3076
        // Predicated region
        $region61: #{tpu_custom_call.1} parent=39 // pred_check
          %p3078 = pneg %p152
        $region62: #{tpu_custom_call.1} parent=39 // pred_check_branch
          %3080 = sbr.rel (%p3078) target = $region64
        $region63: #{tpu_custom_call.1} parent=39 // pred_region
          %s3082 = ssub.s32 128, 128
          %3083 = vsyncadd %s3074, %s3082
          %s3084 = smul.addr %s24, 128
          %s3085 = scalar_lea.hbm %s5, %s3084
          %s3087 = sshll.u32 %s3077, 4
          %s3088 = int_to_ptr.vmem [resolvable:$true] %s3087
          %3090 = dma.vmem_to_hbm [thread:$0]  %s3088, 128, %s3085, %s3074
        $region64: #{tpu_custom_call.1} parent=39 // pred_fallthru
          _
      $region40: #{tpu_custom_call.1} parent=5 // pred_fallthru
        _
      %p3091 = scmp.le.s32.totalorder 2, %s19
      // Predicated region
      $region65: #{tpu_custom_call.1} parent=5 // pred_check
        %p3092 = pneg %p3091
      $region66: #{tpu_custom_call.1} parent=5 // pred_check_branch
        %3094 = sbr.rel (%p3092) target = $region68
      $region67: #{tpu_custom_call.1} parent=5 // pred_region
        %s3095 = ssub.s32 %s19, 2
        // Predicated region
        $region69: #{tpu_custom_call.1} parent=67 // pred_check
          %p3096 = pneg %p158
        $region70: #{tpu_custom_call.1} parent=67 // pred_check_branch
          %3098 = sbr.rel (%p3096) target = $region72
        $region71: #{tpu_custom_call.1} parent=67 // pred_region
          %s3099 = sand.u32 %s143, 1
          %s3100 = scalar_lea.sflag [#allocation4], %s3099
          %s3101 = sand.u32 %s143, 1
          %s3102 = smul.addr %s3101, 8
          %s3103 = scalar_lea.vmem [#allocation11], %s3102
          %3104 = dma.done %s3100, 128
        $region72: #{tpu_custom_call.1} parent=67 // pred_fallthru
          _
      $region68: #{tpu_custom_call.1} parent=5 // pred_fallthru
        _
    $region6: #{tpu_custom_call.1} parent=1 // loop_footer
      %s23 = sadd.s32 1, %s19
    $region7: #{tpu_custom_call.1} parent=1 // loop_footer_branch
      %18 = sbr.rel target = $region3
    $region8: #{tpu_custom_call.1} parent=1 // loop_exit
      _
    %3105 = vsyncpa [#allocation3], 1
    %s3106 = scalar_lea.sflag [#allocation3], 1
    %3107 = vsyncpa %s3106, 1
    %3108 = vsyncpa [#allocation6], 1
    %3109 = vsyncpa [#allocation9], 1
    %3110 = vsyncpa [#allocation4], 1
    %s3111 = scalar_lea.sflag [#allocation4], 1
    %3112 = vsyncpa %s3111, 1

</llo_original>
